<compile_context>
chip_gen: v7x
topology: tpu7x:2x2x1
jax: 0.10.0
libtpu: 0.0.40
codegen_flags: <defaults>
</compile_context>

<pallas_src>
import functools
import re

import jax
import jax.numpy as jnp
from jax.experimental import pallas as pl
from jax.experimental.pallas import tpu as pltpu


H_ACT = 56    # hidden width 50 padded to a multiple of 8 (7 f32 sublane tiles)
H_MXU = 64    # MXU contraction width; rows [H_ACT:H_MXU] are exact zeros


def _round_up(a, b):
    return ((a + b - 1) // b) * b


def _tpu_defaults():
    """(num_tensorcores_per_device, use_bf16_activations) from the device kind."""
    try:
        kind = jax.devices()[0].device_kind.lower()
    except Exception:
        return 1, False
    m = re.search(r"(\d+)", kind)
    gen = int(m.group(1)) if m else 0
    is_v5p = gen == 5 and "lite" not in kind and "5e" not in kind
    num_cores = 2 if (gen >= 7 or gen == 4 or is_v5p) else 1   # megacore chips only
    use_bf16_act = gen >= 6                                    # bf16 VPU/EUP: v6e and later
    return num_cores, use_bf16_act


def _softplus(x, beta, inv_beta):
    # Matches torch.nn.functional.softplus(x, beta=beta, threshold=20):
    #   (1/beta) * log(1 + exp(beta*x)),  linear where beta*x > 20.
    bx = x * beta
    sp = jnp.log1p(jnp.exp(jnp.minimum(bx, 20.0))) * inv_beta
    return jnp.where(bx > 20.0, x, sp)


def _smooth_leaky_relu(x, gamma, beta, inv_beta):
    return _softplus(x, beta, inv_beta) * (1.0 - gamma) + gamma * x


def _meta_loss_kernel(x_ref, w1_ref, w2_ref, w3_ref, o_ref, a1_ref, a2_ref, *,
                      gamma, beta, inv_beta, act_dtype):
    i = pl.program_id(1)        # M-tile axis ("arbitrary": per-core accumulation)

    @pl.when(i == 0)
    def _init():
        # Per-core scalar accumulator, plus persistent exact-zero rows [H_ACT:H_MXU]
        # of the MXU operand scratches (rows [:H_ACT] are overwritten every step).
        o_ref[...] = jnp.zeros_like(o_ref)
        a1_ref[...] = jnp.zeros_like(a1_ref)
        a2_ref[...] = jnp.zeros_like(a2_ref)

    x = x_ref[...]              # (3, TM)   f32, M on the lane axis
    w1 = w1_ref[...]            # (56, 3)   f32, torch (out, in) layout, zero-padded

    # --- Layer 1 (K=3): VPU broadcast multiply-adds (too small for an MXU pass).
    h = (w1[:, 0:1] * x[0:1, :] +
         w1[:, 1:2] * x[1:2, :] +
         w1[:, 2:3] * x[2:3, :])                                    # (56, TM) f32
    a1 = _smooth_leaky_relu(h.astype(act_dtype), gamma, beta, inv_beta)
    a1_ref[:H_ACT, :] = a1.astype(jnp.bfloat16)

    # --- Layer 2: (56,64) @ (64,TM) on the MXU, bf16 operands, f32 accumulation.
    h2 = jnp.dot(w2_ref[...], a1_ref[...],
                 preferred_element_type=jnp.float32)                # (56, TM) f32
    a2 = _smooth_leaky_relu(h2.astype(act_dtype), gamma, beta, inv_beta)
    a2_ref[:H_ACT, :] = a2.astype(jnp.bfloat16)

    # --- Layer 3 + output activation Softplus(beta=1, threshold=20) in f32.
    # TODO(synk): a bundle dump may show the 1-row MXU dot is better as a VPU
    # broadcast-mul + sublane reduce (review item 8); keep the MXU dot for now.
    out = jnp.dot(w3_ref[...], a2_ref[...],
                  preferred_element_type=jnp.float32)               # (1, TM) f32
    out = _softplus(out, 1.0, 1.0)

    # Per-core scalar partial sum; pad-column correction and the final 1/n happen
    # in the wrapper, so no per-tile tail mask is needed here.
    o_ref[...] += jnp.sum(out, axis=1, keepdims=True)               # (1, 1)


def _pad_weights(w1, w2, w3):
    """Zero-pad torch (out, in) Linear weights to the kernel's padded shapes."""
    h1o, _ = w1.shape           # (50, 3)
    h2o, h2i = w2.shape         # (50, 50)
    _, h3i = w3.shape           # (1, 50)
    w1p = jnp.zeros((H_ACT, 3), jnp.float32).at[:h1o, :].set(w1.astype(jnp.float32))
    w2p = jnp.zeros((H_ACT, H_MXU), jnp.float32).at[:h2o, :h2i].set(
        w2.astype(jnp.float32)).astype(jnp.bfloat16)
    w3p = jnp.zeros((1, H_MXU), jnp.float32).at[:, :h3i].set(
        w3.astype(jnp.float32)).astype(jnp.bfloat16)
    return w1p, w2p, w3p


def _zero_column_loss(w2p, w3p, *, gamma, beta, act_dtype):
    """Loss the kernel produces for an all-zero input column.  Mirrors the
    kernel's dtype/cast sequence so padded columns can be subtracted exactly."""
    inv_beta = 1.0 / beta
    a1 = _smooth_leaky_relu(jnp.zeros((H_ACT, 1), act_dtype), gamma, beta, inv_beta)
    a1 = jnp.concatenate([a1.astype(jnp.bfloat16),
                          jnp.zeros((H_MXU - H_ACT, 1), jnp.bfloat16)], axis=0)
    h2 = jnp.dot(w2p, a1, preferred_element_type=jnp.float32)
    a2 = _smooth_leaky_relu(h2.astype(act_dtype), gamma, beta, inv_beta)
    a2 = jnp.concatenate([a2.astype(jnp.bfloat16),
                          jnp.zeros((H_MXU - H_ACT, 1), jnp.bfloat16)], axis=0)
    out = jnp.dot(w3p, a2, preferred_element_type=jnp.float32)
    return _softplus(out, 1.0, 1.0)[0, 0]


def meta_loss_forward(y_pred, y_target, part_y, w1, w2, w3, *,
                      gamma, beta, tile_m=8192, num_cores=None, use_bf16_act=None):
    """Forward pass of MetaLossNetwork.

    y_pred, y_target, part_y: (n, c).
    w1: (50, 3), w2: (50, 50), w3: (1, 50) -- torch (out_features, in_features)
    layout, bias-free Linear weights.
    """
    if num_cores is None or use_bf16_act is None:
        auto_cores, auto_bf16 = _tpu_defaults()
        num_cores = auto_cores if num_cores is None else num_cores
        use_bf16_act = auto_bf16 if use_bf16_act is None else use_bf16_act
    act_dtype = jnp.bfloat16 if use_bf16_act else jnp.float32

    n, c = y_pred.shape
    M = n * c

    # torch: cat([y_pred.T.flatten()[:,None], ...], dim=1) -> rows are class-major.
    # Kept transposed so M sits on the 128-lane axis: X[k, m] = feature k of row m.
    x = jnp.stack([y_pred.T.reshape(-1),
                   y_target.T.reshape(-1),
                   part_y.T.reshape(-1)], axis=0).astype(jnp.float32)   # (3, M)

    w1p, w2p, w3p = _pad_weights(w1, w2, w3)

    # Split M across TensorCores BEFORE tiling, then tile each core's slice.
    m_per_core = pl.cdiv(M, num_cores)
    tm = min(_round_up(int(tile_m), 128), _round_up(m_per_core, 128))
    tiles_per_core = pl.cdiv(m_per_core, tm)
    m_pad = num_cores * tiles_per_core * tm
    if m_pad != M:
        x = jnp.pad(x, ((0, 0), (0, m_pad - M)))

    kernel = functools.partial(
        _meta_loss_kernel, gamma=float(gamma), beta=float(beta),
        inv_beta=1.0 / float(beta), act_dtype=act_dtype)

    # TODO(synk): confirm via xprof on v7x that the "parallel" core axis really
    # shards across both TensorCores; if not, switch it to pltpu.CORE_PARALLEL.
    partials = pl.pallas_call(
        kernel,
        out_shape=jax.ShapeDtypeStruct((num_cores, 1, 1), jnp.float32),
        grid=(num_cores, tiles_per_core),
        in_specs=[
            pl.BlockSpec((3, tm), lambda p, i: (0, p * tiles_per_core + i)),
            pl.BlockSpec((H_ACT, 3), lambda p, i: (0, 0)),
            pl.BlockSpec((H_ACT, H_MXU), lambda p, i: (0, 0)),
            pl.BlockSpec((1, H_MXU), lambda p, i: (0, 0)),
        ],
        out_specs=pl.BlockSpec((None, 1, 1), lambda p, i: (p, 0, 0)),
        scratch_shapes=[pltpu.VMEM((H_MXU, tm), jnp.bfloat16),
                        pltpu.VMEM((H_MXU, tm), jnp.bfloat16)],
        compiler_params=pltpu.CompilerParams(
            dimension_semantics=("parallel", "arbitrary"),
            vmem_limit_bytes=32 * 1024 * 1024),
    )(x, w1p, w2p, w3p)

    loss_sum = jnp.sum(partials)
    if m_pad != M:
        # Every padded column is all-zero and maps to the same constant loss v0;
        # subtract it once instead of masking inside every tile.
        v0 = _zero_column_loss(w2p, w3p, gamma=float(gamma), beta=float(beta),
                               act_dtype=act_dtype)
        loss_sum = loss_sum - (m_pad - M) * v0

    # .view(c, n).sum(dim=0).mean()  ==  sum(all) * (1/n)
    return loss_sum * (1.0 / n)


def _kaiming_normal(key, out_features, in_features):
    # torch.nn.init.kaiming_normal_ default: fan_in, a=0 -> std = sqrt(2/fan_in)
    std = (2.0 / in_features) ** 0.5
    return jax.random.normal(key, (out_features, in_features), jnp.float32) * std


if __name__ == "__main__":
    key = jax.random.PRNGKey(0)
    k_pred, k_targ, k_part, k1, k2, k3 = jax.random.split(key, 6)

    n, c = 64, 10              # n samples, c classes -> M = 640 MLP rows of 3 features
    gamma, beta = 0.01, 10.0

    y_pred = jax.random.normal(k_pred, (n, c), jnp.float32)
    y_target = jax.random.normal(k_targ, (n, c), jnp.float32)
    part_y = jax.random.normal(k_part, (n, c), jnp.float32)

    # Deterministic kaiming-normal init in torch (out, in) layout (synthetic weights).
    w1 = _kaiming_normal(k1, 50, 3)
    w2 = _kaiming_normal(k2, 50, 50)
    w3 = _kaiming_normal(k3, 1, 50)

    loss = meta_loss_forward(y_pred, y_target, part_y, w1, w2, w3,
                             gamma=gamma, beta=beta)
    loss = jax.block_until_ready(loss)

    # Pure-JAX f32 reference matching the torch module exactly.
    def ref():
        xr = jnp.stack([y_pred.T.reshape(-1), y_target.T.reshape(-1),
                        part_y.T.reshape(-1)], axis=1)          # (M, 3)
        h = _smooth_leaky_relu(xr @ w1.T, gamma, beta, 1.0 / beta)
        h = _smooth_leaky_relu(h @ w2.T, gamma, beta, 1.0 / beta)
        o = _softplus(h @ w3.T, 1.0, 1.0)
        return o.reshape(c, n).sum(axis=0).mean()

    r = ref()
    _, _bf16_act = _tpu_defaults()
    # bf16 MXU operands (layers 2/3) and, on v6e/v7x, bf16 hidden activations
    # loosen tolerance vs the pure-f32 reference.
    tol = 3e-2 if _bf16_act else 2e-2
    assert jnp.allclose(loss, r, rtol=tol, atol=tol), (loss, r)
    print("KERNEL_OK")
</pallas_src>

<mosaic_0001>
module attributes {stable_mosaic.version = 11 : i64} {
  func.func @_meta_loss_kernel(%arg0: i32, %arg1: i32, %arg2: memref<3x640xf32, #tpu.memory_space<vmem>>, %arg3: memref<56x3xf32, #tpu.memory_space<vmem>>, %arg4: memref<56x64xbf16, #tpu.memory_space<vmem>>, %arg5: memref<1x64xbf16, #tpu.memory_space<vmem>>, %arg6: memref<1x1x1xf32, #tpu.memory_space<vmem>>, %arg7: memref<64x640xbf16, #tpu.memory_space<vmem>>, %arg8: memref<64x640xbf16, #tpu.memory_space<vmem>>) attributes {dimension_semantics = [#tpu.dimension_semantics<parallel>, #tpu.dimension_semantics<arbitrary>], iteration_bounds = array<i64: 1, 1>, scalar_prefetch = 0 : i64, scratch_operands = 2 : i64, tpu.core_type = #tpu.core_type<tc>, window_params = [{transform_indices = @transform_0, window_bounds = array<i64: 3, 640>}, {pipeline_mode = #tpu.pipeline_mode<synchronous>, transform_indices = @transform_1, window_bounds = array<i64: 56, 3>}, {pipeline_mode = #tpu.pipeline_mode<synchronous>, transform_indices = @transform_2, window_bounds = array<i64: 56, 64>}, {pipeline_mode = #tpu.pipeline_mode<synchronous>, transform_indices = @transform_3, window_bounds = array<i64: 1, 64>}, {transform_indices = @transform_4, window_bounds = array<i64: 1, 1, 1>}]} {
    %c0_i32 = arith.constant 0 : i32
    %0 = arith.cmpi eq, %arg1, %c0_i32 : i32
    %1 = arith.extui %0 : i1 to i32
    %c0_i32_0 = arith.constant 0 : i32
    %2 = arith.cmpi ne, %1, %c0_i32_0 : i32
    scf.if %2 {
      %cst_40 = arith.constant 0.000000e+00 : f32
      %83 = vector.broadcast %cst_40 : f32 to vector<1x1xf32>
      %c0_41 = arith.constant 0 : index
      %c0_42 = arith.constant 0 : index
      %c0_43 = arith.constant 0 : index
      %84 = vector.load %arg6[%c0_41, %c0_42, %c0_43] : memref<1x1x1xf32, #tpu.memory_space<vmem>>, vector<1x1x1xf32>
      %85 = vector.shape_cast %84 : vector<1x1x1xf32> to vector<1x1xf32>
      %86 = vector.shape_cast %83 : vector<1x1xf32> to vector<1x1x1xf32>
      tpu.vector_store %arg6[%c0_41, %c0_42, %c0_43], %86 {strides = array<i32>} : memref<1x1x1xf32, #tpu.memory_space<vmem>>, vector<1x1x1xf32>,
      %cst_44 = arith.constant 0.000000e+00 : bf16
      %87 = vector.broadcast %cst_44 : bf16 to vector<64x640xbf16>
      %c0_45 = arith.constant 0 : index
      %c0_46 = arith.constant 0 : index
      %88 = vector.load %arg7[%c0_45, %c0_46] : memref<64x640xbf16, #tpu.memory_space<vmem>>, vector<64x640xbf16>
      tpu.vector_store %arg7[%c0_45, %c0_46], %87 {strides = array<i32>} : memref<64x640xbf16, #tpu.memory_space<vmem>>, vector<64x640xbf16>,
      %cst_47 = arith.constant 0.000000e+00 : bf16
      %89 = vector.broadcast %cst_47 : bf16 to vector<64x640xbf16>
      %c0_48 = arith.constant 0 : index
      %c0_49 = arith.constant 0 : index
      %90 = vector.load %arg8[%c0_48, %c0_49] : memref<64x640xbf16, #tpu.memory_space<vmem>>, vector<64x640xbf16>
      tpu.vector_store %arg8[%c0_48, %c0_49], %89 {strides = array<i32>} : memref<64x640xbf16, #tpu.memory_space<vmem>>, vector<64x640xbf16>,
    } else {
    }
    %c0 = arith.constant 0 : index
    %c0_1 = arith.constant 0 : index
    %3 = vector.load %arg2[%c0, %c0_1] : memref<3x640xf32, #tpu.memory_space<vmem>>, vector<3x640xf32>
    %c0_2 = arith.constant 0 : index
    %c0_3 = arith.constant 0 : index
    %4 = vector.load %arg3[%c0_2, %c0_3] : memref<56x3xf32, #tpu.memory_space<vmem>>, vector<56x3xf32>
    %5 = vector.extract_strided_slice %4 {offsets = [0, 0], sizes = [56, 1], strides = [1, 1]} : vector<56x3xf32> to vector<56x1xf32>
    %6 = vector.extract_strided_slice %3 {offsets = [0, 0], sizes = [1, 640], strides = [1, 1]} : vector<3x640xf32> to vector<1x640xf32>
    %7 = vector.broadcast %5 : vector<56x1xf32> to vector<56x640xf32>
    %8 = vector.broadcast %6 : vector<1x640xf32> to vector<56x640xf32>
    %9 = arith.mulf %7, %8 : vector<56x640xf32>
    %10 = vector.extract_strided_slice %4 {offsets = [0, 1], sizes = [56, 1], strides = [1, 1]} : vector<56x3xf32> to vector<56x1xf32>
    %11 = vector.extract_strided_slice %3 {offsets = [1, 0], sizes = [1, 640], strides = [1, 1]} : vector<3x640xf32> to vector<1x640xf32>
    %12 = vector.broadcast %10 : vector<56x1xf32> to vector<56x640xf32>
    %13 = vector.broadcast %11 : vector<1x640xf32> to vector<56x640xf32>
    %14 = arith.mulf %12, %13 : vector<56x640xf32>
    %15 = arith.addf %9, %14 : vector<56x640xf32>
    %16 = vector.extract_strided_slice %4 {offsets = [0, 2], sizes = [56, 1], strides = [1, 1]} : vector<56x3xf32> to vector<56x1xf32>
    %17 = vector.extract_strided_slice %3 {offsets = [2, 0], sizes = [1, 640], strides = [1, 1]} : vector<3x640xf32> to vector<1x640xf32>
    %18 = vector.broadcast %16 : vector<56x1xf32> to vector<56x640xf32>
    %19 = vector.broadcast %17 : vector<1x640xf32> to vector<56x640xf32>
    %20 = arith.mulf %18, %19 : vector<56x640xf32>
    %21 = arith.addf %15, %20 : vector<56x640xf32>
    %cst = arith.constant 1.000000e+01 : f32
    %22 = vector.broadcast %cst : f32 to vector<56x640xf32>
    %23 = arith.mulf %21, %22 : vector<56x640xf32>
    %cst_4 = arith.constant 2.000000e+01 : f32
    %24 = vector.broadcast %cst_4 : f32 to vector<56x640xf32>
    %25 = arith.minimumf %23, %24 : vector<56x640xf32>
    %26 = math.exp %25 : vector<56x640xf32>
    %27 = math.log1p %26 : vector<56x640xf32>
    %cst_5 = arith.constant 1.000000e-01 : f32
    %28 = vector.broadcast %cst_5 : f32 to vector<56x640xf32>
    %29 = arith.mulf %27, %28 : vector<56x640xf32>
    %cst_6 = arith.constant 2.000000e+01 : f32
    %30 = vector.broadcast %cst_6 : f32 to vector<56x640xf32>
    %31 = arith.cmpf ogt, %23, %30 : vector<56x640xf32>
    %32 = arith.select %31, %21, %29 : vector<56x640xi1>, vector<56x640xf32>
    %cst_7 = arith.constant 9.900000e-01 : f32
    %33 = vector.broadcast %cst_7 : f32 to vector<56x640xf32>
    %34 = arith.mulf %32, %33 : vector<56x640xf32>
    %cst_8 = arith.constant 0.00999999977 : f32
    %35 = vector.broadcast %cst_8 : f32 to vector<56x640xf32>
    %36 = arith.mulf %35, %21 : vector<56x640xf32>
    %37 = arith.addf %34, %36 : vector<56x640xf32>
    %38 = arith.truncf %37 : vector<56x640xf32> to vector<56x640xbf16>
    %c0_9 = arith.constant 0 : index
    %c0_10 = arith.constant 0 : index
    %39 = vector.load %arg7[%c0_9, %c0_10] : memref<64x640xbf16, #tpu.memory_space<vmem>>, vector<56x640xbf16>
    tpu.vector_store %arg7[%c0_9, %c0_10], %38 {strides = array<i32>} : memref<64x640xbf16, #tpu.memory_space<vmem>>, vector<56x640xbf16>,
    %c0_11 = arith.constant 0 : index
    %c0_12 = arith.constant 0 : index
    %40 = vector.load %arg4[%c0_11, %c0_12] : memref<56x64xbf16, #tpu.memory_space<vmem>>, vector<56x64xbf16>
    %c0_13 = arith.constant 0 : index
    %c0_14 = arith.constant 0 : index
    %41 = vector.load %arg7[%c0_13, %c0_14] : memref<64x640xbf16, #tpu.memory_space<vmem>>, vector<64x640xbf16>
    %cst_15 = arith.constant dense<0.000000e+00> : vector<56x640xf32>
    %42 = tpu.matmul %40, %41, %cst_15 {dimension_numbers = #tpu.dot_dimension_numbers<[1], [0], [0], [1], [0, 0, 1, 1], [], []>} : vector<56x64xbf16>, vector<64x640xbf16>, vector<56x640xf32> -> vector<56x640xf32>
    %cst_16 = arith.constant 1.000000e+01 : f32
    %43 = vector.broadcast %cst_16 : f32 to vector<56x640xf32>
    %44 = arith.mulf %42, %43 : vector<56x640xf32>
    %cst_17 = arith.constant 2.000000e+01 : f32
    %45 = vector.broadcast %cst_17 : f32 to vector<56x640xf32>
    %46 = arith.minimumf %44, %45 : vector<56x640xf32>
    %47 = math.exp %46 : vector<56x640xf32>
    %48 = math.log1p %47 : vector<56x640xf32>
    %cst_18 = arith.constant 1.000000e-01 : f32
    %49 = vector.broadcast %cst_18 : f32 to vector<56x640xf32>
    %50 = arith.mulf %48, %49 : vector<56x640xf32>
    %cst_19 = arith.constant 2.000000e+01 : f32
    %51 = vector.broadcast %cst_19 : f32 to vector<56x640xf32>
    %52 = arith.cmpf ogt, %44, %51 : vector<56x640xf32>
    %53 = arith.select %52, %42, %50 : vector<56x640xi1>, vector<56x640xf32>
    %cst_20 = arith.constant 9.900000e-01 : f32
    %54 = vector.broadcast %cst_20 : f32 to vector<56x640xf32>
    %55 = arith.mulf %53, %54 : vector<56x640xf32>
    %cst_21 = arith.constant 0.00999999977 : f32
    %56 = vector.broadcast %cst_21 : f32 to vector<56x640xf32>
    %57 = arith.mulf %56, %42 : vector<56x640xf32>
    %58 = arith.addf %55, %57 : vector<56x640xf32>
    %59 = arith.truncf %58 : vector<56x640xf32> to vector<56x640xbf16>
    %c0_22 = arith.constant 0 : index
    %c0_23 = arith.constant 0 : index
    %60 = vector.load %arg8[%c0_22, %c0_23] : memref<64x640xbf16, #tpu.memory_space<vmem>>, vector<56x640xbf16>
    tpu.vector_store %arg8[%c0_22, %c0_23], %59 {strides = array<i32>} : memref<64x640xbf16, #tpu.memory_space<vmem>>, vector<56x640xbf16>,
    %c0_24 = arith.constant 0 : index
    %c0_25 = arith.constant 0 : index
    %61 = vector.load %arg5[%c0_24, %c0_25] : memref<1x64xbf16, #tpu.memory_space<vmem>>, vector<1x64xbf16>
    %c0_26 = arith.constant 0 : index
    %c0_27 = arith.constant 0 : index
    %62 = vector.load %arg8[%c0_26, %c0_27] : memref<64x640xbf16, #tpu.memory_space<vmem>>, vector<64x640xbf16>
    %cst_28 = arith.constant dense<0.000000e+00> : vector<1x640xf32>
    %63 = tpu.matmul %61, %62, %cst_28 {dimension_numbers = #tpu.dot_dimension_numbers<[1], [0], [0], [1], [0, 0, 1, 1], [], []>} : vector<1x64xbf16>, vector<64x640xbf16>, vector<1x640xf32> -> vector<1x640xf32>
    %cst_29 = arith.constant 1.000000e+00 : f32
    %64 = vector.broadcast %cst_29 : f32 to vector<1x640xf32>
    %65 = arith.mulf %63, %64 : vector<1x640xf32>
    %cst_30 = arith.constant 2.000000e+01 : f32
    %66 = vector.broadcast %cst_30 : f32 to vector<1x640xf32>
    %67 = arith.minimumf %65, %66 : vector<1x640xf32>
    %68 = math.exp %67 : vector<1x640xf32>
    %69 = math.log1p %68 : vector<1x640xf32>
    %cst_31 = arith.constant 1.000000e+00 : f32
    %70 = vector.broadcast %cst_31 : f32 to vector<1x640xf32>
    %71 = arith.mulf %69, %70 : vector<1x640xf32>
    %cst_32 = arith.constant 2.000000e+01 : f32
    %72 = vector.broadcast %cst_32 : f32 to vector<1x640xf32>
    %73 = arith.cmpf ogt, %65, %72 : vector<1x640xf32>
    %74 = arith.select %73, %63, %71 : vector<1x640xi1>, vector<1x640xf32>
    %c0_33 = arith.constant 0 : index
    %c0_34 = arith.constant 0 : index
    %c0_35 = arith.constant 0 : index
    %75 = vector.load %arg6[%c0_33, %c0_34, %c0_35] : memref<1x1x1xf32, #tpu.memory_space<vmem>>, vector<1x1x1xf32>
    %76 = vector.shape_cast %75 : vector<1x1x1xf32> to vector<1x1xf32>
    %cst_36 = arith.constant dense<0.000000e+00> : vector<1xf32>
    %77 = vector.multi_reduction <add>, %74, %cst_36 [1] : vector<1x640xf32> to vector<1xf32>
    %78 = vector.shape_cast %77 : vector<1xf32> to vector<1x1xf32>
    %79 = arith.addf %76, %78 : vector<1x1xf32>
    %c0_37 = arith.constant 0 : index
    %c0_38 = arith.constant 0 : index
    %c0_39 = arith.constant 0 : index
    %80 = vector.load %arg6[%c0_37, %c0_38, %c0_39] : memref<1x1x1xf32, #tpu.memory_space<vmem>>, vector<1x1x1xf32>
    %81 = vector.shape_cast %80 : vector<1x1x1xf32> to vector<1x1xf32>
    %82 = vector.shape_cast %79 : vector<1x1xf32> to vector<1x1x1xf32>
    tpu.vector_store %arg6[%c0_37, %c0_38, %c0_39], %82 {strides = array<i32>} : memref<1x1x1xf32, #tpu.memory_space<vmem>>, vector<1x1x1xf32>,
    return
  }
  func.func @transform_0(%arg0: i32, %arg1: i32) -> (i32, i32) {
    %c1_i32 = arith.constant 1 : i32
    %0 = arith.muli %arg0, %c1_i32 : i32
    %1 = arith.addi %0, %arg1 : i32
    %c0_i32 = arith.constant 0 : i32
    %c0_i32_0 = arith.constant 0 : i32
    return %c0_i32, %1 : i32, i32
  }
  func.func @transform_1(%arg0: i32, %arg1: i32) -> (i32, i32) {
    %c0_i32 = arith.constant 0 : i32
    %c0_i32_0 = arith.constant 0 : i32
    %c0_i32_1 = arith.constant 0 : i32
    return %c0_i32, %c0_i32_0 : i32, i32
  }
  func.func @transform_2(%arg0: i32, %arg1: i32) -> (i32, i32) {
    %c0_i32 = arith.constant 0 : i32
    %c0_i32_0 = arith.constant 0 : i32
    %c0_i32_1 = arith.constant 0 : i32
    return %c0_i32, %c0_i32_0 : i32, i32
  }
  func.func @transform_3(%arg0: i32, %arg1: i32) -> (i32, i32) {
    %c0_i32 = arith.constant 0 : i32
    %c0_i32_0 = arith.constant 0 : i32
    %c0_i32_1 = arith.constant 0 : i32
    return %c0_i32, %c0_i32_0 : i32, i32
  }
  func.func @transform_4(%arg0: i32, %arg1: i32) -> (i32, i32, i32) {
    %c0_i32 = arith.constant 0 : i32
    %c0_i32_0 = arith.constant 0 : i32
    %c0_i32_1 = arith.constant 0 : i32
    return %arg0, %c0_i32, %c0_i32_0 : i32, i32, i32
  }
}

</mosaic_0001>

<llo_original>
// kernel: tpu_custom_call.1
$region0: #{tpu_custom_call.1}
  #allocation0 [shape = 'u32[]', space=smem, size = 0x4, offset = 0x4, fixed_abs, tag = 'smem constant byte address 0x4 - core index']
  #allocation1 [shape = 'u32[144,128]{1,0:T(1,128)}', space=vmem, size = 0x12000, scoped, tag = 'internal scratch']
  #allocation2 [shape = 'bf16[64,640]{1,0:T(16,128)(2,1)}', space=vmem, size = 0x14000, scoped, tag = 'scratch operand']
  #allocation3 [shape = 'bf16[64,640]{1,0:T(16,128)(2,1)}', space=vmem, size = 0x14000, scoped, tag = 'scratch operand']
  %s0 = inlined_call_operand.vmem [shape: f32[3,640], index: 0, kind: input, shape index: {}]
  %s1 = inlined_call_operand.vmem [shape: f32[56,3], index: 1, kind: input, shape index: {}]
  %s2 = inlined_call_operand.vmem [shape: bf16[56,64], index: 2, kind: input, shape index: {}]
  %s3 = inlined_call_operand.vmem [shape: bf16[1,64], index: 3, kind: input, shape index: {}]
  %s4 = inlined_call_operand.hbm [shape: f32[1,1,1], index: 4, kind: output, shape index: {}]
  %s5 = sld [smem:[#allocation0]]
  $region30: #{tpu_custom_call.1} parent=0
    _
  %s7 = ssub.s32 1, %s5
  %s8 = scalar_select 0, %s7, %s5
  $region1: #{tpu_custom_call.1} parent=0
    #allocation4 [shape = 'u8[512]{0}', space=vmem, size = 0x400, scoped, tag = 'output window, operand 0, single buffered']
    #allocation5 [shape = 's32[1]{0}', space=sflag, size = 0x4, scoped, tag = 'scoped memory for tpu_custom_call.1']
    %9 = vsyncpa [#allocation5], 0
    // Predicated region
    $region2: #{tpu_custom_call.1} parent=1 // pred_check
      _
    $region3: #{tpu_custom_call.1} parent=1 // pred_check_branch
      %11 = sbr.rel (0) target = $region5
    $region4: #{tpu_custom_call.1} parent=1 // pred_region
      %s12 = sadd.s32 0, 0
      %s13 = smul.u32 5, %s12
      %p14 = scmp.lt.s32.totalorder %s13, 4
      %s15 = scalar_select %p14, %s13, 4
      %s16 = smul.addr %s15, 4
      %s17 = scalar_lea.vmem %s0, %s16
      %s18 = sadd.s32 0, 0
      %s19 = smul.u32 5, %s18
    $region5: #{tpu_custom_call.1} parent=1 // pred_fallthru
      _
    // Predicated region
    $region6: #{tpu_custom_call.1} parent=1 // pred_check
      _
    $region7: #{tpu_custom_call.1} parent=1 // pred_check_branch
      %21 = sbr.rel (0) target = $region9
    $region8: #{tpu_custom_call.1} parent=1 // pred_region
      _
    $region9: #{tpu_custom_call.1} parent=1 // pred_fallthru
      _
    // Predicated region
    $region10: #{tpu_custom_call.1} parent=1 // pred_check
      _
    $region11: #{tpu_custom_call.1} parent=1 // pred_check_branch
      %23 = sbr.rel (0) target = $region13
    $region12: #{tpu_custom_call.1} parent=1 // pred_region
      _
    $region13: #{tpu_custom_call.1} parent=1 // pred_fallthru
      _
    // Predicated region
    $region14: #{tpu_custom_call.1} parent=1 // pred_check
      _
    $region15: #{tpu_custom_call.1} parent=1 // pred_check_branch
      %25 = sbr.rel (0) target = $region17
    $region16: #{tpu_custom_call.1} parent=1 // pred_region
      _
    $region17: #{tpu_custom_call.1} parent=1 // pred_fallthru
      _
    %s26 = sadd.s32 0, 0
    %s27 = smul.u32 5, %s26
    %p28 = scmp.lt.s32.totalorder %s27, 4
    %s29 = scalar_select %p28, %s27, 4
    %s30 = smul.addr %s29, 4
    %s31 = scalar_lea.vmem %s0, %s30
    %s32 = sadd.s32 0, 0
    %s33 = smul.u32 5, %s32
    %p34 = scmp.lt.s32.totalorder %s33, 4
    %s35 = scalar_select %p34, %s33, 4
    %s36 = smul.addr %s35, 4
    %s37 = scalar_lea.vmem %s0, %s36
    %s38 = sadd.s32 0, 0
    %s39 = smul.u32 5, %s38
    %p41 = scmp.eq.s32.totalorder 0, 0
    // Predicated region
    $region18: #{tpu_custom_call.1} parent=1 // pred_check
      %p42 = pneg %p41
    $region19: #{tpu_custom_call.1} parent=1 // pred_check_branch
      %44 = sbr.rel (%p42) target = $region21
    $region20: #{tpu_custom_call.1} parent=1 // pred_region
      %vm45 = vcmask 0
      %46 = vst.msk [vmem:[#allocation4] sm:$0x1] %vm45, 0.0
      %47 = vst [vmem:[#allocation2] sm:$0xff] 0
      %48 = vst [vmem:[#allocation2 + $0x8] sm:$0xff] 0
      %49 = vst [vmem:[#allocation2 + $0x10] sm:$0xff] 0
      %50 = vst [vmem:[#allocation2 + $0x18] sm:$0xff] 0
      %51 = vst [vmem:[#allocation2 + $0x20] sm:$0xff] 0
      %52 = vst [vmem:[#allocation2 + $0x28] sm:$0xff] 0
      %53 = vst [vmem:[#allocation2 + $0x30] sm:$0xff] 0
      %54 = vst [vmem:[#allocation2 + $0x38] sm:$0xff] 0
      %55 = vst [vmem:[#allocation2 + $0x40] sm:$0xff] 0
      %56 = vst [vmem:[#allocation2 + $0x48] sm:$0xff] 0
      %57 = vst [vmem:[#allocation2 + $0x50] sm:$0xff] 0
      %58 = vst [vmem:[#allocation2 + $0x58] sm:$0xff] 0
      %59 = vst [vmem:[#allocation2 + $0x60] sm:$0xff] 0
      %60 = vst [vmem:[#allocation2 + $0x68] sm:$0xff] 0
      %61 = vst [vmem:[#allocation2 + $0x70] sm:$0xff] 0
      %62 = vst [vmem:[#allocation2 + $0x78] sm:$0xff] 0
      %63 = vst [vmem:[#allocation2 + $0x80] sm:$0xff] 0
      %64 = vst [vmem:[#allocation2 + $0x88] sm:$0xff] 0
      %65 = vst [vmem:[#allocation2 + $0x90] sm:$0xff] 0
      %66 = vst [vmem:[#allocation2 + $0x98] sm:$0xff] 0
      %67 = vst [vmem:[#allocation3] sm:$0xff] 0
      %68 = vst [vmem:[#allocation3 + $0x8] sm:$0xff] 0
      %69 = vst [vmem:[#allocation3 + $0x10] sm:$0xff] 0
      %70 = vst [vmem:[#allocation3 + $0x18] sm:$0xff] 0
      %71 = vst [vmem:[#allocation3 + $0x20] sm:$0xff] 0
      %72 = vst [vmem:[#allocation3 + $0x28] sm:$0xff] 0
      %73 = vst [vmem:[#allocation3 + $0x30] sm:$0xff] 0
      %74 = vst [vmem:[#allocation3 + $0x38] sm:$0xff] 0
      %75 = vst [vmem:[#allocation3 + $0x40] sm:$0xff] 0
      %76 = vst [vmem:[#allocation3 + $0x48] sm:$0xff] 0
      %77 = vst [vmem:[#allocation3 + $0x50] sm:$0xff] 0
      %78 = vst [vmem:[#allocation3 + $0x58] sm:$0xff] 0
      %79 = vst [vmem:[#allocation3 + $0x60] sm:$0xff] 0
      %80 = vst [vmem:[#allocation3 + $0x68] sm:$0xff] 0
      %81 = vst [vmem:[#allocation3 + $0x70] sm:$0xff] 0
      %82 = vst [vmem:[#allocation3 + $0x78] sm:$0xff] 0
      %83 = vst [vmem:[#allocation3 + $0x80] sm:$0xff] 0
      %84 = vst [vmem:[#allocation3 + $0x88] sm:$0xff] 0
      %85 = vst [vmem:[#allocation3 + $0x90] sm:$0xff] 0
      %86 = vst [vmem:[#allocation3 + $0x98] sm:$0xff] 0
    $region21: #{tpu_custom_call.1} parent=1 // pred_fallthru
      _
    %v87 = vld [vmem:[%s37] sm:$0x77]
    %v88 = vld [vmem:[%s37 + $0x8] sm:$0x77]
    %v89 = vld [vmem:[%s37 + $0x10] sm:$0x7]
    %v90 = vld [vmem:[%s1] sm:$0xff]
    %v91 = vld [vmem:[%s1 + $0x8] sm:$0xff]
    %v92 = vld [vmem:[%s1 + $0x10] sm:$0xff]
    %v93 = vld [vmem:[%s1 + $0x18] sm:$0xff]
    %v94 = vld [vmem:[%s1 + $0x20] sm:$0xff]
    %v95 = vld [vmem:[%s1 + $0x28] sm:$0xff]
    %v96 = vld [vmem:[%s1 + $0x30] sm:$0xff]
    %98 = vset.pattern.permute.xlu0 0
    %99 = vperm.xlu0 %98, %v90
    %v100 = vpop.permute.xlu0 %99
    %103 = vset.pattern.permute.xlu0 0
    %104 = vperm.xlu0 %103, %v91
    %v105 = vpop.permute.xlu0 %104
    %108 = vset.pattern.permute.xlu0 0
    %109 = vperm.xlu0 %108, %v92
    %v110 = vpop.permute.xlu0 %109
    %113 = vset.pattern.permute.xlu0 0
    %114 = vperm.xlu0 %113, %v93
    %v115 = vpop.permute.xlu0 %114
    %118 = vset.pattern.permute.xlu0 0
    %119 = vperm.xlu0 %118, %v94
    %v120 = vpop.permute.xlu0 %119
    %123 = vset.pattern.permute.xlu0 0
    %124 = vperm.xlu0 %123, %v95
    %v125 = vpop.permute.xlu0 %124
    %128 = vset.pattern.permute.xlu0 0
    %129 = vperm.xlu0 %128, %v96
    %v130 = vpop.permute.xlu0 %129
    %v135 = vlaneseq
    %v136 = vshrl.u32 %v135, 7
    %v137 = vsub.s32 0, %v136
    %v138 = vrot.slane %v87, %v137
    %v139 = vlaneseq
    %v140 = vshrl.u32 %v139, 7
    %v141 = vsub.s32 4, %v140
    %v142 = vrot.slane %v87, %v141
    %v143 = vlaneseq
    %v144 = vshrl.u32 %v143, 7
    %v145 = vsub.s32 0, %v144
    %v146 = vrot.slane %v88, %v145
    %v147 = vlaneseq
    %v148 = vshrl.u32 %v147, 7
    %v149 = vsub.s32 4, %v148
    %v150 = vrot.slane %v88, %v149
    %v151 = vlaneseq
    %v152 = vshrl.u32 %v151, 7
    %v153 = vsub.s32 0, %v152
    %v154 = vrot.slane %v89, %v153
    %v160 = vlaneseq
    %v161 = vshrl.u32 %v160, 7
    %v162 = vsub.s32 0, %v161
    %v163 = vrot.slane %v138, %v162
    %v164 = vlaneseq
    %v165 = vshrl.u32 %v164, 7
    %v166 = vsub.s32 0, %v165
    %v167 = vrot.slane %v142, %v166
    %v168 = vlaneseq
    %v169 = vshrl.u32 %v168, 7
    %v170 = vsub.s32 0, %v169
    %v171 = vrot.slane %v146, %v170
    %v172 = vlaneseq
    %v173 = vshrl.u32 %v172, 7
    %v174 = vsub.s32 0, %v173
    %v175 = vrot.slane %v150, %v174
    %v176 = vlaneseq
    %v177 = vshrl.u32 %v176, 7
    %v178 = vsub.s32 0, %v177
    %v179 = vrot.slane %v154, %v178
    %v180 = vmul.f32 %v100, %v163
    %v181 = vmul.f32 %v100, %v167
    %v182 = vmul.f32 %v100, %v171
    %v183 = vmul.f32 %v100, %v175
    %v184 = vmul.f32 %v100, %v179
    %v185 = vmul.f32 %v105, %v163
    %v186 = vmul.f32 %v105, %v167
    %v187 = vmul.f32 %v105, %v171
    %v188 = vmul.f32 %v105, %v175
    %v189 = vmul.f32 %v105, %v179
    %v190 = vmul.f32 %v110, %v163
    %v191 = vmul.f32 %v110, %v167
    %v192 = vmul.f32 %v110, %v171
    %v193 = vmul.f32 %v110, %v175
    %v194 = vmul.f32 %v110, %v179
    %v195 = vmul.f32 %v115, %v163
    %v196 = vmul.f32 %v115, %v167
    %v197 = vmul.f32 %v115, %v171
    %v198 = vmul.f32 %v115, %v175
    %v199 = vmul.f32 %v115, %v179
    %v200 = vmul.f32 %v120, %v163
    %v201 = vmul.f32 %v120, %v167
    %v202 = vmul.f32 %v120, %v171
    %v203 = vmul.f32 %v120, %v175
    %v204 = vmul.f32 %v120, %v179
    %v205 = vmul.f32 %v125, %v163
    %v206 = vmul.f32 %v125, %v167
    %v207 = vmul.f32 %v125, %v171
    %v208 = vmul.f32 %v125, %v175
    %v209 = vmul.f32 %v125, %v179
    %v210 = vmul.f32 %v130, %v163
    %v211 = vmul.f32 %v130, %v167
    %v212 = vmul.f32 %v130, %v171
    %v213 = vmul.f32 %v130, %v175
    %v214 = vmul.f32 %v130, %v179
    %215 = vset.pattern.permute.xlu0 1
    %216 = vperm.xlu0 %215, %v90
    %v217 = vpop.permute.xlu0 %216
    %219 = vset.pattern.permute.xlu0 1
    %220 = vperm.xlu0 %219, %v91
    %v221 = vpop.permute.xlu0 %220
    %223 = vset.pattern.permute.xlu0 1
    %224 = vperm.xlu0 %223, %v92
    %v225 = vpop.permute.xlu0 %224
    %227 = vset.pattern.permute.xlu0 1
    %228 = vperm.xlu0 %227, %v93
    %v229 = vpop.permute.xlu0 %228
    %231 = vset.pattern.permute.xlu0 1
    %232 = vperm.xlu0 %231, %v94
    %v233 = vpop.permute.xlu0 %232
    %235 = vset.pattern.permute.xlu0 1
    %236 = vperm.xlu0 %235, %v95
    %v237 = vpop.permute.xlu0 %236
    %239 = vset.pattern.permute.xlu0 1
    %240 = vperm.xlu0 %239, %v96
    %v241 = vpop.permute.xlu0 %240
    %v243 = vlaneseq
    %v244 = vshrl.u32 %v243, 7
    %v245 = vsub.s32 1, %v244
    %v246 = vrot.slane %v87, %v245
    %v247 = vlaneseq
    %v248 = vshrl.u32 %v247, 7
    %v249 = vsub.s32 5, %v248
    %v250 = vrot.slane %v87, %v249
    %v251 = vlaneseq
    %v252 = vshrl.u32 %v251, 7
    %v253 = vsub.s32 1, %v252
    %v254 = vrot.slane %v88, %v253
    %v255 = vlaneseq
    %v256 = vshrl.u32 %v255, 7
    %v257 = vsub.s32 5, %v256
    %v258 = vrot.slane %v88, %v257
    %v259 = vlaneseq
    %v260 = vshrl.u32 %v259, 7
    %v261 = vsub.s32 1, %v260
    %v262 = vrot.slane %v89, %v261
    %v268 = vlaneseq
    %v269 = vshrl.u32 %v268, 7
    %v270 = vsub.s32 1, %v269
    %v271 = vrot.slane %v246, %v270
    %v272 = vlaneseq
    %v273 = vshrl.u32 %v272, 7
    %v274 = vsub.s32 1, %v273
    %v275 = vrot.slane %v250, %v274
    %v276 = vlaneseq
    %v277 = vshrl.u32 %v276, 7
    %v278 = vsub.s32 1, %v277
    %v279 = vrot.slane %v254, %v278
    %v280 = vlaneseq
    %v281 = vshrl.u32 %v280, 7
    %v282 = vsub.s32 1, %v281
    %v283 = vrot.slane %v258, %v282
    %v284 = vlaneseq
    %v285 = vshrl.u32 %v284, 7
    %v286 = vsub.s32 1, %v285
    %v287 = vrot.slane %v262, %v286
    %v288 = vmul.f32 %v217, %v271
    %v289 = vmul.f32 %v217, %v275
    %v290 = vmul.f32 %v217, %v279
    %v291 = vmul.f32 %v217, %v283
    %v292 = vmul.f32 %v217, %v287
    %v293 = vmul.f32 %v221, %v271
    %v294 = vmul.f32 %v221, %v275
    %v295 = vmul.f32 %v221, %v279
    %v296 = vmul.f32 %v221, %v283
    %v297 = vmul.f32 %v221, %v287
    %v298 = vmul.f32 %v225, %v271
    %v299 = vmul.f32 %v225, %v275
    %v300 = vmul.f32 %v225, %v279
    %v301 = vmul.f32 %v225, %v283
    %v302 = vmul.f32 %v225, %v287
    %v303 = vmul.f32 %v229, %v271
    %v304 = vmul.f32 %v229, %v275
    %v305 = vmul.f32 %v229, %v279
    %v306 = vmul.f32 %v229, %v283
    %v307 = vmul.f32 %v229, %v287
    %v308 = vmul.f32 %v233, %v271
    %v309 = vmul.f32 %v233, %v275
    %v310 = vmul.f32 %v233, %v279
    %v311 = vmul.f32 %v233, %v283
    %v312 = vmul.f32 %v233, %v287
    %v313 = vmul.f32 %v237, %v271
    %v314 = vmul.f32 %v237, %v275
    %v315 = vmul.f32 %v237, %v279
    %v316 = vmul.f32 %v237, %v283
    %v317 = vmul.f32 %v237, %v287
    %v318 = vmul.f32 %v241, %v271
    %v319 = vmul.f32 %v241, %v275
    %v320 = vmul.f32 %v241, %v279
    %v321 = vmul.f32 %v241, %v283
    %v322 = vmul.f32 %v241, %v287
    %v323 = vadd.f32 %v180, %v288
    %v324 = vadd.f32 %v181, %v289
    %v325 = vadd.f32 %v182, %v290
    %v326 = vadd.f32 %v183, %v291
    %v327 = vadd.f32 %v184, %v292
    %v328 = vadd.f32 %v185, %v293
    %v329 = vadd.f32 %v186, %v294
    %v330 = vadd.f32 %v187, %v295
    %v331 = vadd.f32 %v188, %v296
    %v332 = vadd.f32 %v189, %v297
    %v333 = vadd.f32 %v190, %v298
    %v334 = vadd.f32 %v191, %v299
    %v335 = vadd.f32 %v192, %v300
    %v336 = vadd.f32 %v193, %v301
    %v337 = vadd.f32 %v194, %v302
    %v338 = vadd.f32 %v195, %v303
    %v339 = vadd.f32 %v196, %v304
    %v340 = vadd.f32 %v197, %v305
    %v341 = vadd.f32 %v198, %v306
    %v342 = vadd.f32 %v199, %v307
    %v343 = vadd.f32 %v200, %v308
    %v344 = vadd.f32 %v201, %v309
    %v345 = vadd.f32 %v202, %v310
    %v346 = vadd.f32 %v203, %v311
    %v347 = vadd.f32 %v204, %v312
    %v348 = vadd.f32 %v205, %v313
    %v349 = vadd.f32 %v206, %v314
    %v350 = vadd.f32 %v207, %v315
    %v351 = vadd.f32 %v208, %v316
    %v352 = vadd.f32 %v209, %v317
    %v353 = vadd.f32 %v210, %v318
    %v354 = vadd.f32 %v211, %v319
    %v355 = vadd.f32 %v212, %v320
    %v356 = vadd.f32 %v213, %v321
    %v357 = vadd.f32 %v214, %v322
    %358 = vset.pattern.permute.xlu0 2
    %359 = vperm.xlu0 %358, %v90
    %v360 = vpop.permute.xlu0 %359
    %362 = vset.pattern.permute.xlu0 2
    %363 = vperm.xlu0 %362, %v91
    %v364 = vpop.permute.xlu0 %363
    %366 = vset.pattern.permute.xlu0 2
    %367 = vperm.xlu0 %366, %v92
    %v368 = vpop.permute.xlu0 %367
    %370 = vset.pattern.permute.xlu0 2
    %371 = vperm.xlu0 %370, %v93
    %v372 = vpop.permute.xlu0 %371
    %374 = vset.pattern.permute.xlu0 2
    %375 = vperm.xlu0 %374, %v94
    %v376 = vpop.permute.xlu0 %375
    %378 = vset.pattern.permute.xlu0 2
    %379 = vperm.xlu0 %378, %v95
    %v380 = vpop.permute.xlu0 %379
    %382 = vset.pattern.permute.xlu0 2
    %383 = vperm.xlu0 %382, %v96
    %v384 = vpop.permute.xlu0 %383
    %v386 = vlaneseq
    %v387 = vshrl.u32 %v386, 7
    %v388 = vsub.s32 2, %v387
    %v389 = vrot.slane %v87, %v388
    %v390 = vlaneseq
    %v391 = vshrl.u32 %v390, 7
    %v392 = vsub.s32 6, %v391
    %v393 = vrot.slane %v87, %v392
    %v394 = vlaneseq
    %v395 = vshrl.u32 %v394, 7
    %v396 = vsub.s32 2, %v395
    %v397 = vrot.slane %v88, %v396
    %v398 = vlaneseq
    %v399 = vshrl.u32 %v398, 7
    %v400 = vsub.s32 6, %v399
    %v401 = vrot.slane %v88, %v400
    %v402 = vlaneseq
    %v403 = vshrl.u32 %v402, 7
    %v404 = vsub.s32 2, %v403
    %v405 = vrot.slane %v89, %v404
    %v411 = vlaneseq
    %v412 = vshrl.u32 %v411, 7
    %v413 = vsub.s32 2, %v412
    %v414 = vrot.slane %v389, %v413
    %v415 = vlaneseq
    %v416 = vshrl.u32 %v415, 7
    %v417 = vsub.s32 2, %v416
    %v418 = vrot.slane %v393, %v417
    %v419 = vlaneseq
    %v420 = vshrl.u32 %v419, 7
    %v421 = vsub.s32 2, %v420
    %v422 = vrot.slane %v397, %v421
    %v423 = vlaneseq
    %v424 = vshrl.u32 %v423, 7
    %v425 = vsub.s32 2, %v424
    %v426 = vrot.slane %v401, %v425
    %v427 = vlaneseq
    %v428 = vshrl.u32 %v427, 7
    %v429 = vsub.s32 2, %v428
    %v430 = vrot.slane %v405, %v429
    %v431 = vmul.f32 %v360, %v414
    %v432 = vmul.f32 %v360, %v418
    %v433 = vmul.f32 %v360, %v422
    %v434 = vmul.f32 %v360, %v426
    %v435 = vmul.f32 %v360, %v430
    %v436 = vmul.f32 %v364, %v414
    %v437 = vmul.f32 %v364, %v418
    %v438 = vmul.f32 %v364, %v422
    %v439 = vmul.f32 %v364, %v426
    %v440 = vmul.f32 %v364, %v430
    %v441 = vmul.f32 %v368, %v414
    %v442 = vmul.f32 %v368, %v418
    %v443 = vmul.f32 %v368, %v422
    %v444 = vmul.f32 %v368, %v426
    %v445 = vmul.f32 %v368, %v430
    %v446 = vmul.f32 %v372, %v414
    %v447 = vmul.f32 %v372, %v418
    %v448 = vmul.f32 %v372, %v422
    %v449 = vmul.f32 %v372, %v426
    %v450 = vmul.f32 %v372, %v430
    %v451 = vmul.f32 %v376, %v414
    %v452 = vmul.f32 %v376, %v418
    %v453 = vmul.f32 %v376, %v422
    %v454 = vmul.f32 %v376, %v426
    %v455 = vmul.f32 %v376, %v430
    %v456 = vmul.f32 %v380, %v414
    %v457 = vmul.f32 %v380, %v418
    %v458 = vmul.f32 %v380, %v422
    %v459 = vmul.f32 %v380, %v426
    %v460 = vmul.f32 %v380, %v430
    %v461 = vmul.f32 %v384, %v414
    %v462 = vmul.f32 %v384, %v418
    %v463 = vmul.f32 %v384, %v422
    %v464 = vmul.f32 %v384, %v426
    %v465 = vmul.f32 %v384, %v430
    %v466 = vadd.f32 %v323, %v431
    %v467 = vadd.f32 %v324, %v432
    %v468 = vadd.f32 %v325, %v433
    %v469 = vadd.f32 %v326, %v434
    %v470 = vadd.f32 %v327, %v435
    %v471 = vadd.f32 %v328, %v436
    %v472 = vadd.f32 %v329, %v437
    %v473 = vadd.f32 %v330, %v438
    %v474 = vadd.f32 %v331, %v439
    %v475 = vadd.f32 %v332, %v440
    %v476 = vadd.f32 %v333, %v441
    %v477 = vadd.f32 %v334, %v442
    %v478 = vadd.f32 %v335, %v443
    %v479 = vadd.f32 %v336, %v444
    %v480 = vadd.f32 %v337, %v445
    %v481 = vadd.f32 %v338, %v446
    %v482 = vadd.f32 %v339, %v447
    %v483 = vadd.f32 %v340, %v448
    %v484 = vadd.f32 %v341, %v449
    %v485 = vadd.f32 %v342, %v450
    %v486 = vadd.f32 %v343, %v451
    %v487 = vadd.f32 %v344, %v452
    %v488 = vadd.f32 %v345, %v453
    %v489 = vadd.f32 %v346, %v454
    %v490 = vadd.f32 %v347, %v455
    %v491 = vadd.f32 %v348, %v456
    %v492 = vadd.f32 %v349, %v457
    %v493 = vadd.f32 %v350, %v458
    %v494 = vadd.f32 %v351, %v459
    %v495 = vadd.f32 %v352, %v460
    %v496 = vadd.f32 %v353, %v461
    %v497 = vadd.f32 %v354, %v462
    %v498 = vadd.f32 %v355, %v463
    %v499 = vadd.f32 %v356, %v464
    %v500 = vadd.f32 %v357, %v465
    %v501 = vmul.f32 %v466, 10.0
    %v502 = vmul.f32 %v467, 10.0
    %v503 = vmul.f32 %v468, 10.0
    %v504 = vmul.f32 %v469, 10.0
    %v505 = vmul.f32 %v470, 10.0
    %v506 = vmul.f32 %v471, 10.0
    %v507 = vmul.f32 %v472, 10.0
    %v508 = vmul.f32 %v473, 10.0
    %v509 = vmul.f32 %v474, 10.0
    %v510 = vmul.f32 %v475, 10.0
    %v511 = vmul.f32 %v476, 10.0
    %v512 = vmul.f32 %v477, 10.0
    %v513 = vmul.f32 %v478, 10.0
    %v514 = vmul.f32 %v479, 10.0
    %v515 = vmul.f32 %v480, 10.0
    %v516 = vmul.f32 %v481, 10.0
    %v517 = vmul.f32 %v482, 10.0
    %v518 = vmul.f32 %v483, 10.0
    %v519 = vmul.f32 %v484, 10.0
    %v520 = vmul.f32 %v485, 10.0
    %v521 = vmul.f32 %v486, 10.0
    %v522 = vmul.f32 %v487, 10.0
    %v523 = vmul.f32 %v488, 10.0
    %v524 = vmul.f32 %v489, 10.0
    %v525 = vmul.f32 %v490, 10.0
    %v526 = vmul.f32 %v491, 10.0
    %v527 = vmul.f32 %v492, 10.0
    %v528 = vmul.f32 %v493, 10.0
    %v529 = vmul.f32 %v494, 10.0
    %v530 = vmul.f32 %v495, 10.0
    %v531 = vmul.f32 %v496, 10.0
    %v532 = vmul.f32 %v497, 10.0
    %v533 = vmul.f32 %v498, 10.0
    %v534 = vmul.f32 %v499, 10.0
    %v535 = vmul.f32 %v500, 10.0
    %v536 = vmin.f32 %v501, 20.0
    %v537 = vmin.f32 %v502, 20.0
    %v538 = vmin.f32 %v503, 20.0
    %v539 = vmin.f32 %v504, 20.0
    %v540 = vmin.f32 %v505, 20.0
    %v541 = vmin.f32 %v506, 20.0
    %v542 = vmin.f32 %v507, 20.0
    %v543 = vmin.f32 %v508, 20.0
    %v544 = vmin.f32 %v509, 20.0
    %v545 = vmin.f32 %v510, 20.0
    %v546 = vmin.f32 %v511, 20.0
    %v547 = vmin.f32 %v512, 20.0
    %v548 = vmin.f32 %v513, 20.0
    %v549 = vmin.f32 %v514, 20.0
    %v550 = vmin.f32 %v515, 20.0
    %v551 = vmin.f32 %v516, 20.0
    %v552 = vmin.f32 %v517, 20.0
    %v553 = vmin.f32 %v518, 20.0
    %v554 = vmin.f32 %v519, 20.0
    %v555 = vmin.f32 %v520, 20.0
    %v556 = vmin.f32 %v521, 20.0
    %v557 = vmin.f32 %v522, 20.0
    %v558 = vmin.f32 %v523, 20.0
    %v559 = vmin.f32 %v524, 20.0
    %v560 = vmin.f32 %v525, 20.0
    %v561 = vmin.f32 %v526, 20.0
    %v562 = vmin.f32 %v527, 20.0
    %v563 = vmin.f32 %v528, 20.0
    %v564 = vmin.f32 %v529, 20.0
    %v565 = vmin.f32 %v530, 20.0
    %v566 = vmin.f32 %v531, 20.0
    %v567 = vmin.f32 %v532, 20.0
    %v568 = vmin.f32 %v533, 20.0
    %v569 = vmin.f32 %v534, 20.0
    %v570 = vmin.f32 %v535, 20.0
    %v571 = vmul.f32 %v536, 1.442695
    %v572 = vpow.pop %v571
    %v573 = vmul.f32 %v537, 1.442695
    %v574 = vpow.pop %v573
    %v575 = vmul.f32 %v538, 1.442695
    %v576 = vpow.pop %v575
    %v577 = vmul.f32 %v539, 1.442695
    %v578 = vpow.pop %v577
    %v579 = vmul.f32 %v540, 1.442695
    %v580 = vpow.pop %v579
    %v581 = vmul.f32 %v541, 1.442695
    %v582 = vpow.pop %v581
    %v583 = vmul.f32 %v542, 1.442695
    %v584 = vpow.pop %v583
    %v585 = vmul.f32 %v543, 1.442695
    %v586 = vpow.pop %v585
    %v587 = vmul.f32 %v544, 1.442695
    %v588 = vpow.pop %v587
    %v589 = vmul.f32 %v545, 1.442695
    %v590 = vpow.pop %v589
    %v591 = vmul.f32 %v546, 1.442695
    %v592 = vpow.pop %v591
    %v593 = vmul.f32 %v547, 1.442695
    %v594 = vpow.pop %v593
    %v595 = vmul.f32 %v548, 1.442695
    %v596 = vpow.pop %v595
    %v597 = vmul.f32 %v549, 1.442695
    %v598 = vpow.pop %v597
    %v599 = vmul.f32 %v550, 1.442695
    %v600 = vpow.pop %v599
    %v601 = vmul.f32 %v551, 1.442695
    %v602 = vpow.pop %v601
    %v603 = vmul.f32 %v552, 1.442695
    %v604 = vpow.pop %v603
    %v605 = vmul.f32 %v553, 1.442695
    %v606 = vpow.pop %v605
    %v607 = vmul.f32 %v554, 1.442695
    %v608 = vpow.pop %v607
    %v609 = vmul.f32 %v555, 1.442695
    %v610 = vpow.pop %v609
    %v611 = vmul.f32 %v556, 1.442695
    %v612 = vpow.pop %v611
    %v613 = vmul.f32 %v557, 1.442695
    %v614 = vpow.pop %v613
    %v615 = vmul.f32 %v558, 1.442695
    %v616 = vpow.pop %v615
    %v617 = vmul.f32 %v559, 1.442695
    %v618 = vpow.pop %v617
    %v619 = vmul.f32 %v560, 1.442695
    %v620 = vpow.pop %v619
    %v621 = vmul.f32 %v561, 1.442695
    %v622 = vpow.pop %v621
    %v623 = vmul.f32 %v562, 1.442695
    %v624 = vpow.pop %v623
    %v625 = vmul.f32 %v563, 1.442695
    %v626 = vpow.pop %v625
    %v627 = vmul.f32 %v564, 1.442695
    %v628 = vpow.pop %v627
    %v629 = vmul.f32 %v565, 1.442695
    %v630 = vpow.pop %v629
    %v631 = vmul.f32 %v566, 1.442695
    %v632 = vpow.pop %v631
    %v633 = vmul.f32 %v567, 1.442695
    %v634 = vpow.pop %v633
    %v635 = vmul.f32 %v568, 1.442695
    %v636 = vpow.pop %v635
    %v637 = vmul.f32 %v569, 1.442695
    %v638 = vpow.pop %v637
    %v639 = vmul.f32 %v570, 1.442695
    %v640 = vpow.pop %v639
    %v641 = vadd.f32 %v572, 1.0
    %v642 = vlog2.pop %v641
    %v643 = vmul.f32 %v642, 0.6931472
    %v644 = vmul.f32 -0.5, %v572
    %v645 = vadd.f32 %v644, 1.0
    %v646 = vmul.f32 %v645, %v572
    %v647 = vand.u32 2147483647, %v572
    %vm648 = vcmp.lt.f32.partialorder %v647, 0.0004427343
    %v649 = vsel %vm648, %v646, %v643
    %v650 = vadd.f32 %v574, 1.0
    %v651 = vlog2.pop %v650
    %v652 = vmul.f32 %v651, 0.6931472
    %v653 = vmul.f32 -0.5, %v574
    %v654 = vadd.f32 %v653, 1.0
    %v655 = vmul.f32 %v654, %v574
    %v656 = vand.u32 2147483647, %v574
    %vm657 = vcmp.lt.f32.partialorder %v656, 0.0004427343
    %v658 = vsel %vm657, %v655, %v652
    %v659 = vadd.f32 %v576, 1.0
    %v660 = vlog2.pop %v659
    %v661 = vmul.f32 %v660, 0.6931472
    %v662 = vmul.f32 -0.5, %v576
    %v663 = vadd.f32 %v662, 1.0
    %v664 = vmul.f32 %v663, %v576
    %v665 = vand.u32 2147483647, %v576
    %vm666 = vcmp.lt.f32.partialorder %v665, 0.0004427343
    %v667 = vsel %vm666, %v664, %v661
    %v668 = vadd.f32 %v578, 1.0
    %v669 = vlog2.pop %v668
    %v670 = vmul.f32 %v669, 0.6931472
    %v671 = vmul.f32 -0.5, %v578
    %v672 = vadd.f32 %v671, 1.0
    %v673 = vmul.f32 %v672, %v578
    %v674 = vand.u32 2147483647, %v578
    %vm675 = vcmp.lt.f32.partialorder %v674, 0.0004427343
    %v676 = vsel %vm675, %v673, %v670
    %v677 = vadd.f32 %v580, 1.0
    %v678 = vlog2.pop %v677
    %v679 = vmul.f32 %v678, 0.6931472
    %v680 = vmul.f32 -0.5, %v580
    %v681 = vadd.f32 %v680, 1.0
    %v682 = vmul.f32 %v681, %v580
    %v683 = vand.u32 2147483647, %v580
    %vm684 = vcmp.lt.f32.partialorder %v683, 0.0004427343
    %v685 = vsel %vm684, %v682, %v679
    %v686 = vadd.f32 %v582, 1.0
    %v687 = vlog2.pop %v686
    %v688 = vmul.f32 %v687, 0.6931472
    %v689 = vmul.f32 -0.5, %v582
    %v690 = vadd.f32 %v689, 1.0
    %v691 = vmul.f32 %v690, %v582
    %v692 = vand.u32 2147483647, %v582
    %vm693 = vcmp.lt.f32.partialorder %v692, 0.0004427343
    %v694 = vsel %vm693, %v691, %v688
    %v695 = vadd.f32 %v584, 1.0
    %v696 = vlog2.pop %v695
    %v697 = vmul.f32 %v696, 0.6931472
    %v698 = vmul.f32 -0.5, %v584
    %v699 = vadd.f32 %v698, 1.0
    %v700 = vmul.f32 %v699, %v584
    %v701 = vand.u32 2147483647, %v584
    %vm702 = vcmp.lt.f32.partialorder %v701, 0.0004427343
    %v703 = vsel %vm702, %v700, %v697
    %v704 = vadd.f32 %v586, 1.0
    %v705 = vlog2.pop %v704
    %v706 = vmul.f32 %v705, 0.6931472
    %v707 = vmul.f32 -0.5, %v586
    %v708 = vadd.f32 %v707, 1.0
    %v709 = vmul.f32 %v708, %v586
    %v710 = vand.u32 2147483647, %v586
    %vm711 = vcmp.lt.f32.partialorder %v710, 0.0004427343
    %v712 = vsel %vm711, %v709, %v706
    %v713 = vadd.f32 %v588, 1.0
    %v714 = vlog2.pop %v713
    %v715 = vmul.f32 %v714, 0.6931472
    %v716 = vmul.f32 -0.5, %v588
    %v717 = vadd.f32 %v716, 1.0
    %v718 = vmul.f32 %v717, %v588
    %v719 = vand.u32 2147483647, %v588
    %vm720 = vcmp.lt.f32.partialorder %v719, 0.0004427343
    %v721 = vsel %vm720, %v718, %v715
    %v722 = vadd.f32 %v590, 1.0
    %v723 = vlog2.pop %v722
    %v724 = vmul.f32 %v723, 0.6931472
    %v725 = vmul.f32 -0.5, %v590
    %v726 = vadd.f32 %v725, 1.0
    %v727 = vmul.f32 %v726, %v590
    %v728 = vand.u32 2147483647, %v590
    %vm729 = vcmp.lt.f32.partialorder %v728, 0.0004427343
    %v730 = vsel %vm729, %v727, %v724
    %v731 = vadd.f32 %v592, 1.0
    %v732 = vlog2.pop %v731
    %v733 = vmul.f32 %v732, 0.6931472
    %v734 = vmul.f32 -0.5, %v592
    %v735 = vadd.f32 %v734, 1.0
    %v736 = vmul.f32 %v735, %v592
    %v737 = vand.u32 2147483647, %v592
    %vm738 = vcmp.lt.f32.partialorder %v737, 0.0004427343
    %v739 = vsel %vm738, %v736, %v733
    %v740 = vadd.f32 %v594, 1.0
    %v741 = vlog2.pop %v740
    %v742 = vmul.f32 %v741, 0.6931472
    %v743 = vmul.f32 -0.5, %v594
    %v744 = vadd.f32 %v743, 1.0
    %v745 = vmul.f32 %v744, %v594
    %v746 = vand.u32 2147483647, %v594
    %vm747 = vcmp.lt.f32.partialorder %v746, 0.0004427343
    %v748 = vsel %vm747, %v745, %v742
    %v749 = vadd.f32 %v596, 1.0
    %v750 = vlog2.pop %v749
    %v751 = vmul.f32 %v750, 0.6931472
    %v752 = vmul.f32 -0.5, %v596
    %v753 = vadd.f32 %v752, 1.0
    %v754 = vmul.f32 %v753, %v596
    %v755 = vand.u32 2147483647, %v596
    %vm756 = vcmp.lt.f32.partialorder %v755, 0.0004427343
    %v757 = vsel %vm756, %v754, %v751
    %v758 = vadd.f32 %v598, 1.0
    %v759 = vlog2.pop %v758
    %v760 = vmul.f32 %v759, 0.6931472
    %v761 = vmul.f32 -0.5, %v598
    %v762 = vadd.f32 %v761, 1.0
    %v763 = vmul.f32 %v762, %v598
    %v764 = vand.u32 2147483647, %v598
    %vm765 = vcmp.lt.f32.partialorder %v764, 0.0004427343
    %v766 = vsel %vm765, %v763, %v760
    %v767 = vadd.f32 %v600, 1.0
    %v768 = vlog2.pop %v767
    %v769 = vmul.f32 %v768, 0.6931472
    %v770 = vmul.f32 -0.5, %v600
    %v771 = vadd.f32 %v770, 1.0
    %v772 = vmul.f32 %v771, %v600
    %v773 = vand.u32 2147483647, %v600
    %vm774 = vcmp.lt.f32.partialorder %v773, 0.0004427343
    %v775 = vsel %vm774, %v772, %v769
    %v776 = vadd.f32 %v602, 1.0
    %v777 = vlog2.pop %v776
    %v778 = vmul.f32 %v777, 0.6931472
    %v779 = vmul.f32 -0.5, %v602
    %v780 = vadd.f32 %v779, 1.0
    %v781 = vmul.f32 %v780, %v602
    %v782 = vand.u32 2147483647, %v602
    %vm783 = vcmp.lt.f32.partialorder %v782, 0.0004427343
    %v784 = vsel %vm783, %v781, %v778
    %v785 = vadd.f32 %v604, 1.0
    %v786 = vlog2.pop %v785
    %v787 = vmul.f32 %v786, 0.6931472
    %v788 = vmul.f32 -0.5, %v604
    %v789 = vadd.f32 %v788, 1.0
    %v790 = vmul.f32 %v789, %v604
    %v791 = vand.u32 2147483647, %v604
    %vm792 = vcmp.lt.f32.partialorder %v791, 0.0004427343
    %v793 = vsel %vm792, %v790, %v787
    %v794 = vadd.f32 %v606, 1.0
    %v795 = vlog2.pop %v794
    %v796 = vmul.f32 %v795, 0.6931472
    %v797 = vmul.f32 -0.5, %v606
    %v798 = vadd.f32 %v797, 1.0
    %v799 = vmul.f32 %v798, %v606
    %v800 = vand.u32 2147483647, %v606
    %vm801 = vcmp.lt.f32.partialorder %v800, 0.0004427343
    %v802 = vsel %vm801, %v799, %v796
    %v803 = vadd.f32 %v608, 1.0
    %v804 = vlog2.pop %v803
    %v805 = vmul.f32 %v804, 0.6931472
    %v806 = vmul.f32 -0.5, %v608
    %v807 = vadd.f32 %v806, 1.0
    %v808 = vmul.f32 %v807, %v608
    %v809 = vand.u32 2147483647, %v608
    %vm810 = vcmp.lt.f32.partialorder %v809, 0.0004427343
    %v811 = vsel %vm810, %v808, %v805
    %v812 = vadd.f32 %v610, 1.0
    %v813 = vlog2.pop %v812
    %v814 = vmul.f32 %v813, 0.6931472
    %v815 = vmul.f32 -0.5, %v610
    %v816 = vadd.f32 %v815, 1.0
    %v817 = vmul.f32 %v816, %v610
    %v818 = vand.u32 2147483647, %v610
    %vm819 = vcmp.lt.f32.partialorder %v818, 0.0004427343
    %v820 = vsel %vm819, %v817, %v814
    %v821 = vadd.f32 %v612, 1.0
    %v822 = vlog2.pop %v821
    %v823 = vmul.f32 %v822, 0.6931472
    %v824 = vmul.f32 -0.5, %v612
    %v825 = vadd.f32 %v824, 1.0
    %v826 = vmul.f32 %v825, %v612
    %v827 = vand.u32 2147483647, %v612
    %vm828 = vcmp.lt.f32.partialorder %v827, 0.0004427343
    %v829 = vsel %vm828, %v826, %v823
    %v830 = vadd.f32 %v614, 1.0
    %v831 = vlog2.pop %v830
    %v832 = vmul.f32 %v831, 0.6931472
    %v833 = vmul.f32 -0.5, %v614
    %v834 = vadd.f32 %v833, 1.0
    %v835 = vmul.f32 %v834, %v614
    %v836 = vand.u32 2147483647, %v614
    %vm837 = vcmp.lt.f32.partialorder %v836, 0.0004427343
    %v838 = vsel %vm837, %v835, %v832
    %v839 = vadd.f32 %v616, 1.0
    %v840 = vlog2.pop %v839
    %v841 = vmul.f32 %v840, 0.6931472
    %v842 = vmul.f32 -0.5, %v616
    %v843 = vadd.f32 %v842, 1.0
    %v844 = vmul.f32 %v843, %v616
    %v845 = vand.u32 2147483647, %v616
    %vm846 = vcmp.lt.f32.partialorder %v845, 0.0004427343
    %v847 = vsel %vm846, %v844, %v841
    %v848 = vadd.f32 %v618, 1.0
    %v849 = vlog2.pop %v848
    %v850 = vmul.f32 %v849, 0.6931472
    %v851 = vmul.f32 -0.5, %v618
    %v852 = vadd.f32 %v851, 1.0
    %v853 = vmul.f32 %v852, %v618
    %v854 = vand.u32 2147483647, %v618
    %vm855 = vcmp.lt.f32.partialorder %v854, 0.0004427343
    %v856 = vsel %vm855, %v853, %v850
    %v857 = vadd.f32 %v620, 1.0
    %v858 = vlog2.pop %v857
    %v859 = vmul.f32 %v858, 0.6931472
    %v860 = vmul.f32 -0.5, %v620
    %v861 = vadd.f32 %v860, 1.0
    %v862 = vmul.f32 %v861, %v620
    %v863 = vand.u32 2147483647, %v620
    %vm864 = vcmp.lt.f32.partialorder %v863, 0.0004427343
    %v865 = vsel %vm864, %v862, %v859
    %v866 = vadd.f32 %v622, 1.0
    %v867 = vlog2.pop %v866
    %v868 = vmul.f32 %v867, 0.6931472
    %v869 = vmul.f32 -0.5, %v622
    %v870 = vadd.f32 %v869, 1.0
    %v871 = vmul.f32 %v870, %v622
    %v872 = vand.u32 2147483647, %v622
    %vm873 = vcmp.lt.f32.partialorder %v872, 0.0004427343
    %v874 = vsel %vm873, %v871, %v868
    %v875 = vadd.f32 %v624, 1.0
    %v876 = vlog2.pop %v875
    %v877 = vmul.f32 %v876, 0.6931472
    %v878 = vmul.f32 -0.5, %v624
    %v879 = vadd.f32 %v878, 1.0
    %v880 = vmul.f32 %v879, %v624
    %v881 = vand.u32 2147483647, %v624
    %vm882 = vcmp.lt.f32.partialorder %v881, 0.0004427343
    %v883 = vsel %vm882, %v880, %v877
    %v884 = vadd.f32 %v626, 1.0
    %v885 = vlog2.pop %v884
    %v886 = vmul.f32 %v885, 0.6931472
    %v887 = vmul.f32 -0.5, %v626
    %v888 = vadd.f32 %v887, 1.0
    %v889 = vmul.f32 %v888, %v626
    %v890 = vand.u32 2147483647, %v626
    %vm891 = vcmp.lt.f32.partialorder %v890, 0.0004427343
    %v892 = vsel %vm891, %v889, %v886
    %v893 = vadd.f32 %v628, 1.0
    %v894 = vlog2.pop %v893
    %v895 = vmul.f32 %v894, 0.6931472
    %v896 = vmul.f32 -0.5, %v628
    %v897 = vadd.f32 %v896, 1.0
    %v898 = vmul.f32 %v897, %v628
    %v899 = vand.u32 2147483647, %v628
    %vm900 = vcmp.lt.f32.partialorder %v899, 0.0004427343
    %v901 = vsel %vm900, %v898, %v895
    %v902 = vadd.f32 %v630, 1.0
    %v903 = vlog2.pop %v902
    %v904 = vmul.f32 %v903, 0.6931472
    %v905 = vmul.f32 -0.5, %v630
    %v906 = vadd.f32 %v905, 1.0
    %v907 = vmul.f32 %v906, %v630
    %v908 = vand.u32 2147483647, %v630
    %vm909 = vcmp.lt.f32.partialorder %v908, 0.0004427343
    %v910 = vsel %vm909, %v907, %v904
    %v911 = vadd.f32 %v632, 1.0
    %v912 = vlog2.pop %v911
    %v913 = vmul.f32 %v912, 0.6931472
    %v914 = vmul.f32 -0.5, %v632
    %v915 = vadd.f32 %v914, 1.0
    %v916 = vmul.f32 %v915, %v632
    %v917 = vand.u32 2147483647, %v632
    %vm918 = vcmp.lt.f32.partialorder %v917, 0.0004427343
    %v919 = vsel %vm918, %v916, %v913
    %v920 = vadd.f32 %v634, 1.0
    %v921 = vlog2.pop %v920
    %v922 = vmul.f32 %v921, 0.6931472
    %v923 = vmul.f32 -0.5, %v634
    %v924 = vadd.f32 %v923, 1.0
    %v925 = vmul.f32 %v924, %v634
    %v926 = vand.u32 2147483647, %v634
    %vm927 = vcmp.lt.f32.partialorder %v926, 0.0004427343
    %v928 = vsel %vm927, %v925, %v922
    %v929 = vadd.f32 %v636, 1.0
    %v930 = vlog2.pop %v929
    %v931 = vmul.f32 %v930, 0.6931472
    %v932 = vmul.f32 -0.5, %v636
    %v933 = vadd.f32 %v932, 1.0
    %v934 = vmul.f32 %v933, %v636
    %v935 = vand.u32 2147483647, %v636
    %vm936 = vcmp.lt.f32.partialorder %v935, 0.0004427343
    %v937 = vsel %vm936, %v934, %v931
    %v938 = vadd.f32 %v638, 1.0
    %v939 = vlog2.pop %v938
    %v940 = vmul.f32 %v939, 0.6931472
    %v941 = vmul.f32 -0.5, %v638
    %v942 = vadd.f32 %v941, 1.0
    %v943 = vmul.f32 %v942, %v638
    %v944 = vand.u32 2147483647, %v638
    %vm945 = vcmp.lt.f32.partialorder %v944, 0.0004427343
    %v946 = vsel %vm945, %v943, %v940
    %v947 = vadd.f32 %v640, 1.0
    %v948 = vlog2.pop %v947
    %v949 = vmul.f32 %v948, 0.6931472
    %v950 = vmul.f32 -0.5, %v640
    %v951 = vadd.f32 %v950, 1.0
    %v952 = vmul.f32 %v951, %v640
    %v953 = vand.u32 2147483647, %v640
    %vm954 = vcmp.lt.f32.partialorder %v953, 0.0004427343
    %v955 = vsel %vm954, %v952, %v949
    %v956 = vmul.f32 %v649, 0.1
    %v957 = vmul.f32 %v658, 0.1
    %v958 = vmul.f32 %v667, 0.1
    %v959 = vmul.f32 %v676, 0.1
    %v960 = vmul.f32 %v685, 0.1
    %v961 = vmul.f32 %v694, 0.1
    %v962 = vmul.f32 %v703, 0.1
    %v963 = vmul.f32 %v712, 0.1
    %v964 = vmul.f32 %v721, 0.1
    %v965 = vmul.f32 %v730, 0.1
    %v966 = vmul.f32 %v739, 0.1
    %v967 = vmul.f32 %v748, 0.1
    %v968 = vmul.f32 %v757, 0.1
    %v969 = vmul.f32 %v766, 0.1
    %v970 = vmul.f32 %v775, 0.1
    %v971 = vmul.f32 %v784, 0.1
    %v972 = vmul.f32 %v793, 0.1
    %v973 = vmul.f32 %v802, 0.1
    %v974 = vmul.f32 %v811, 0.1
    %v975 = vmul.f32 %v820, 0.1
    %v976 = vmul.f32 %v829, 0.1
    %v977 = vmul.f32 %v838, 0.1
    %v978 = vmul.f32 %v847, 0.1
    %v979 = vmul.f32 %v856, 0.1
    %v980 = vmul.f32 %v865, 0.1
    %v981 = vmul.f32 %v874, 0.1
    %v982 = vmul.f32 %v883, 0.1
    %v983 = vmul.f32 %v892, 0.1
    %v984 = vmul.f32 %v901, 0.1
    %v985 = vmul.f32 %v910, 0.1
    %v986 = vmul.f32 %v919, 0.1
    %v987 = vmul.f32 %v928, 0.1
    %v988 = vmul.f32 %v937, 0.1
    %v989 = vmul.f32 %v946, 0.1
    %v990 = vmul.f32 %v955, 0.1
    %vm991 = vcmp.gt.f32.partialorder %v501, 20.0
    %vm992 = vcmp.gt.f32.partialorder %v502, 20.0
    %vm993 = vcmp.gt.f32.partialorder %v503, 20.0
    %vm994 = vcmp.gt.f32.partialorder %v504, 20.0
    %vm995 = vcmp.gt.f32.partialorder %v505, 20.0
    %vm996 = vcmp.gt.f32.partialorder %v506, 20.0
    %vm997 = vcmp.gt.f32.partialorder %v507, 20.0
    %vm998 = vcmp.gt.f32.partialorder %v508, 20.0
    %vm999 = vcmp.gt.f32.partialorder %v509, 20.0
    %vm1000 = vcmp.gt.f32.partialorder %v510, 20.0
    %vm1001 = vcmp.gt.f32.partialorder %v511, 20.0
    %vm1002 = vcmp.gt.f32.partialorder %v512, 20.0
    %vm1003 = vcmp.gt.f32.partialorder %v513, 20.0
    %vm1004 = vcmp.gt.f32.partialorder %v514, 20.0
    %vm1005 = vcmp.gt.f32.partialorder %v515, 20.0
    %vm1006 = vcmp.gt.f32.partialorder %v516, 20.0
    %vm1007 = vcmp.gt.f32.partialorder %v517, 20.0
    %vm1008 = vcmp.gt.f32.partialorder %v518, 20.0
    %vm1009 = vcmp.gt.f32.partialorder %v519, 20.0
    %vm1010 = vcmp.gt.f32.partialorder %v520, 20.0
    %vm1011 = vcmp.gt.f32.partialorder %v521, 20.0
    %vm1012 = vcmp.gt.f32.partialorder %v522, 20.0
    %vm1013 = vcmp.gt.f32.partialorder %v523, 20.0
    %vm1014 = vcmp.gt.f32.partialorder %v524, 20.0
    %vm1015 = vcmp.gt.f32.partialorder %v525, 20.0
    %vm1016 = vcmp.gt.f32.partialorder %v526, 20.0
    %vm1017 = vcmp.gt.f32.partialorder %v527, 20.0
    %vm1018 = vcmp.gt.f32.partialorder %v528, 20.0
    %vm1019 = vcmp.gt.f32.partialorder %v529, 20.0
    %vm1020 = vcmp.gt.f32.partialorder %v530, 20.0
    %vm1021 = vcmp.gt.f32.partialorder %v531, 20.0
    %vm1022 = vcmp.gt.f32.partialorder %v532, 20.0
    %vm1023 = vcmp.gt.f32.partialorder %v533, 20.0
    %vm1024 = vcmp.gt.f32.partialorder %v534, 20.0
    %vm1025 = vcmp.gt.f32.partialorder %v535, 20.0
    %v1026 = vsel %vm991, %v466, %v956
    %v1027 = vsel %vm992, %v467, %v957
    %v1028 = vsel %vm993, %v468, %v958
    %v1029 = vsel %vm994, %v469, %v959
    %v1030 = vsel %vm995, %v470, %v960
    %v1031 = vsel %vm996, %v471, %v961
    %v1032 = vsel %vm997, %v472, %v962
    %v1033 = vsel %vm998, %v473, %v963
    %v1034 = vsel %vm999, %v474, %v964
    %v1035 = vsel %vm1000, %v475, %v965
    %v1036 = vsel %vm1001, %v476, %v966
    %v1037 = vsel %vm1002, %v477, %v967
    %v1038 = vsel %vm1003, %v478, %v968
    %v1039 = vsel %vm1004, %v479, %v969
    %v1040 = vsel %vm1005, %v480, %v970
    %v1041 = vsel %vm1006, %v481, %v971
    %v1042 = vsel %vm1007, %v482, %v972
    %v1043 = vsel %vm1008, %v483, %v973
    %v1044 = vsel %vm1009, %v484, %v974
    %v1045 = vsel %vm1010, %v485, %v975
    %v1046 = vsel %vm1011, %v486, %v976
    %v1047 = vsel %vm1012, %v487, %v977
    %v1048 = vsel %vm1013, %v488, %v978
    %v1049 = vsel %vm1014, %v489, %v979
    %v1050 = vsel %vm1015, %v490, %v980
    %v1051 = vsel %vm1016, %v491, %v981
    %v1052 = vsel %vm1017, %v492, %v982
    %v1053 = vsel %vm1018, %v493, %v983
    %v1054 = vsel %vm1019, %v494, %v984
    %v1055 = vsel %vm1020, %v495, %v985
    %v1056 = vsel %vm1021, %v496, %v986
    %v1057 = vsel %vm1022, %v497, %v987
    %v1058 = vsel %vm1023, %v498, %v988
    %v1059 = vsel %vm1024, %v499, %v989
    %v1060 = vsel %vm1025, %v500, %v990
    %v1061 = vmul.f32 %v1026, 0.99
    %v1062 = vmul.f32 %v1027, 0.99
    %v1063 = vmul.f32 %v1028, 0.99
    %v1064 = vmul.f32 %v1029, 0.99
    %v1065 = vmul.f32 %v1030, 0.99
    %v1066 = vmul.f32 %v1031, 0.99
    %v1067 = vmul.f32 %v1032, 0.99
    %v1068 = vmul.f32 %v1033, 0.99
    %v1069 = vmul.f32 %v1034, 0.99
    %v1070 = vmul.f32 %v1035, 0.99
    %v1071 = vmul.f32 %v1036, 0.99
    %v1072 = vmul.f32 %v1037, 0.99
    %v1073 = vmul.f32 %v1038, 0.99
    %v1074 = vmul.f32 %v1039, 0.99
    %v1075 = vmul.f32 %v1040, 0.99
    %v1076 = vmul.f32 %v1041, 0.99
    %v1077 = vmul.f32 %v1042, 0.99
    %v1078 = vmul.f32 %v1043, 0.99
    %v1079 = vmul.f32 %v1044, 0.99
    %v1080 = vmul.f32 %v1045, 0.99
    %v1081 = vmul.f32 %v1046, 0.99
    %v1082 = vmul.f32 %v1047, 0.99
    %v1083 = vmul.f32 %v1048, 0.99
    %v1084 = vmul.f32 %v1049, 0.99
    %v1085 = vmul.f32 %v1050, 0.99
    %v1086 = vmul.f32 %v1051, 0.99
    %v1087 = vmul.f32 %v1052, 0.99
    %v1088 = vmul.f32 %v1053, 0.99
    %v1089 = vmul.f32 %v1054, 0.99
    %v1090 = vmul.f32 %v1055, 0.99
    %v1091 = vmul.f32 %v1056, 0.99
    %v1092 = vmul.f32 %v1057, 0.99
    %v1093 = vmul.f32 %v1058, 0.99
    %v1094 = vmul.f32 %v1059, 0.99
    %v1095 = vmul.f32 %v1060, 0.99
    %v1096 = vmul.f32 %v466, 0.01
    %v1097 = vmul.f32 %v467, 0.01
    %v1098 = vmul.f32 %v468, 0.01
    %v1099 = vmul.f32 %v469, 0.01
    %v1100 = vmul.f32 %v470, 0.01
    %v1101 = vmul.f32 %v471, 0.01
    %v1102 = vmul.f32 %v472, 0.01
    %v1103 = vmul.f32 %v473, 0.01
    %v1104 = vmul.f32 %v474, 0.01
    %v1105 = vmul.f32 %v475, 0.01
    %v1106 = vmul.f32 %v476, 0.01
    %v1107 = vmul.f32 %v477, 0.01
    %v1108 = vmul.f32 %v478, 0.01
    %v1109 = vmul.f32 %v479, 0.01
    %v1110 = vmul.f32 %v480, 0.01
    %v1111 = vmul.f32 %v481, 0.01
    %v1112 = vmul.f32 %v482, 0.01
    %v1113 = vmul.f32 %v483, 0.01
    %v1114 = vmul.f32 %v484, 0.01
    %v1115 = vmul.f32 %v485, 0.01
    %v1116 = vmul.f32 %v486, 0.01
    %v1117 = vmul.f32 %v487, 0.01
    %v1118 = vmul.f32 %v488, 0.01
    %v1119 = vmul.f32 %v489, 0.01
    %v1120 = vmul.f32 %v490, 0.01
    %v1121 = vmul.f32 %v491, 0.01
    %v1122 = vmul.f32 %v492, 0.01
    %v1123 = vmul.f32 %v493, 0.01
    %v1124 = vmul.f32 %v494, 0.01
    %v1125 = vmul.f32 %v495, 0.01
    %v1126 = vmul.f32 %v496, 0.01
    %v1127 = vmul.f32 %v497, 0.01
    %v1128 = vmul.f32 %v498, 0.01
    %v1129 = vmul.f32 %v499, 0.01
    %v1130 = vmul.f32 %v500, 0.01
    %v1131 = vadd.f32 %v1061, %v1096
    %v1132 = vadd.f32 %v1062, %v1097
    %v1133 = vadd.f32 %v1063, %v1098
    %v1134 = vadd.f32 %v1064, %v1099
    %v1135 = vadd.f32 %v1065, %v1100
    %v1136 = vadd.f32 %v1066, %v1101
    %v1137 = vadd.f32 %v1067, %v1102
    %v1138 = vadd.f32 %v1068, %v1103
    %v1139 = vadd.f32 %v1069, %v1104
    %v1140 = vadd.f32 %v1070, %v1105
    %v1141 = vadd.f32 %v1071, %v1106
    %v1142 = vadd.f32 %v1072, %v1107
    %v1143 = vadd.f32 %v1073, %v1108
    %v1144 = vadd.f32 %v1074, %v1109
    %v1145 = vadd.f32 %v1075, %v1110
    %v1146 = vadd.f32 %v1076, %v1111
    %v1147 = vadd.f32 %v1077, %v1112
    %v1148 = vadd.f32 %v1078, %v1113
    %v1149 = vadd.f32 %v1079, %v1114
    %v1150 = vadd.f32 %v1080, %v1115
    %v1151 = vadd.f32 %v1081, %v1116
    %v1152 = vadd.f32 %v1082, %v1117
    %v1153 = vadd.f32 %v1083, %v1118
    %v1154 = vadd.f32 %v1084, %v1119
    %v1155 = vadd.f32 %v1085, %v1120
    %v1156 = vadd.f32 %v1086, %v1121
    %v1157 = vadd.f32 %v1087, %v1122
    %v1158 = vadd.f32 %v1088, %v1123
    %v1159 = vadd.f32 %v1089, %v1124
    %v1160 = vadd.f32 %v1090, %v1125
    %v1161 = vadd.f32 %v1091, %v1126
    %v1162 = vadd.f32 %v1092, %v1127
    %v1163 = vadd.f32 %v1093, %v1128
    %v1164 = vadd.f32 %v1094, %v1129
    %v1165 = vadd.f32 %v1095, %v1130
    %v1166 = vpack.c.bf16 %v1136, %v1131
    %v1167 = vpack.c.bf16 %v1137, %v1132
    %v1168 = vpack.c.bf16 %v1138, %v1133
    %v1169 = vpack.c.bf16 %v1139, %v1134
    %v1170 = vpack.c.bf16 %v1140, %v1135
    %v1171 = vpack.c.bf16 %v1146, %v1141
    %v1172 = vpack.c.bf16 %v1147, %v1142
    %v1173 = vpack.c.bf16 %v1148, %v1143
    %v1174 = vpack.c.bf16 %v1149, %v1144
    %v1175 = vpack.c.bf16 %v1150, %v1145
    %v1176 = vpack.c.bf16 %v1156, %v1151
    %v1177 = vpack.c.bf16 %v1157, %v1152
    %v1178 = vpack.c.bf16 %v1158, %v1153
    %v1179 = vpack.c.bf16 %v1159, %v1154
    %v1180 = vpack.c.bf16 %v1160, %v1155
    %v1181 = vpack.c.bf16 %v1161, %v1161
    %v1182 = vpack.c.bf16 %v1162, %v1162
    %v1183 = vpack.c.bf16 %v1163, %v1163
    %v1184 = vpack.c.bf16 %v1164, %v1164
    %v1185 = vpack.c.bf16 %v1165, %v1165
    %1186 = vst [vmem:[#allocation2] sm:$0xff] %v1166
    %1187 = vst [vmem:[#allocation2 + $0x8] sm:$0xff] %v1167
    %1188 = vst [vmem:[#allocation2 + $0x10] sm:$0xff] %v1168
    %1189 = vst [vmem:[#allocation2 + $0x18] sm:$0xff] %v1169
    %1190 = vst [vmem:[#allocation2 + $0x20] sm:$0xff] %v1170
    %1191 = vst [vmem:[#allocation2 + $0x28] sm:$0xff] %v1171
    %1192 = vst [vmem:[#allocation2 + $0x30] sm:$0xff] %v1172
    %1193 = vst [vmem:[#allocation2 + $0x38] sm:$0xff] %v1173
    %1194 = vst [vmem:[#allocation2 + $0x40] sm:$0xff] %v1174
    %1195 = vst [vmem:[#allocation2 + $0x48] sm:$0xff] %v1175
    %1196 = vst [vmem:[#allocation2 + $0x50] sm:$0xff] %v1176
    %1197 = vst [vmem:[#allocation2 + $0x58] sm:$0xff] %v1177
    %1198 = vst [vmem:[#allocation2 + $0x60] sm:$0xff] %v1178
    %1199 = vst [vmem:[#allocation2 + $0x68] sm:$0xff] %v1179
    %1200 = vst [vmem:[#allocation2 + $0x70] sm:$0xff] %v1180
    %1201 = vst [vmem:[#allocation2 + $0x78] sm:$0xf] %v1181
    %1202 = vst [vmem:[#allocation2 + $0x80] sm:$0xf] %v1182
    %1203 = vst [vmem:[#allocation2 + $0x88] sm:$0xf] %v1183
    %1204 = vst [vmem:[#allocation2 + $0x90] sm:$0xf] %v1184
    %1205 = vst [vmem:[#allocation2 + $0x98] sm:$0xf] %v1185
    %v1206 = vld [vmem:[%s2] sm:$0xf]
    %v1207 = vld [vmem:[%s2 + $0x4] sm:$0xf]
    %v1208 = vld [vmem:[%s2 + $0x8] sm:$0xf]
    %v1209 = vld [vmem:[%s2 + $0xc] sm:$0xf]
    %v1210 = vld [vmem:[%s2 + $0x10] sm:$0xf]
    %v1211 = vld [vmem:[%s2 + $0x14] sm:$0xf]
    %v1212 = vld [vmem:[%s2 + $0x18] sm:$0xf]
    %v1213 = vld [vmem:[#allocation2] sm:$0xff]
    %v1214 = vld [vmem:[#allocation2 + $0x8] sm:$0xff]
    %v1215 = vld [vmem:[#allocation2 + $0x10] sm:$0xff]
    %v1216 = vld [vmem:[#allocation2 + $0x18] sm:$0xff]
    %v1217 = vld [vmem:[#allocation2 + $0x20] sm:$0xff]
    %v1218 = vld [vmem:[#allocation2 + $0x28] sm:$0xff]
    %v1219 = vld [vmem:[#allocation2 + $0x30] sm:$0xff]
    %v1220 = vld [vmem:[#allocation2 + $0x38] sm:$0xff]
    %v1221 = vld [vmem:[#allocation2 + $0x40] sm:$0xff]
    %v1222 = vld [vmem:[#allocation2 + $0x48] sm:$0xff]
    %v1223 = vld [vmem:[#allocation2 + $0x50] sm:$0xff]
    %v1224 = vld [vmem:[#allocation2 + $0x58] sm:$0xff]
    %v1225 = vld [vmem:[#allocation2 + $0x60] sm:$0xff]
    %v1226 = vld [vmem:[#allocation2 + $0x68] sm:$0xff]
    %v1227 = vld [vmem:[#allocation2 + $0x70] sm:$0xff]
    %v1228 = vld [vmem:[#allocation2 + $0x78] sm:$0xff]
    %v1229 = vld [vmem:[#allocation2 + $0x80] sm:$0xff]
    %v1230 = vld [vmem:[#allocation2 + $0x88] sm:$0xff]
    %v1231 = vld [vmem:[#allocation2 + $0x90] sm:$0xff]
    %v1232 = vld [vmem:[#allocation2 + $0x98] sm:$0xff]
    %v1240 = vunpack.c.l.b16 %v1206
    %v1241 = vunpack.c.l.b16 %v1207
    %v1242 = vunpack.c.l.b16 %v1208
    %v1243 = vunpack.c.l.b16 %v1209
    %v1244 = vunpack.c.l.b16 %v1210
    %v1245 = vunpack.c.l.b16 %v1211
    %v1246 = vunpack.c.l.b16 %v1212
    %v1247 = vpack.c.b16 %v1241, %v1240
    %v1248 = vpack.c.b16 %v1243, %v1242
    %v1249 = vpack.c.b16 %v1245, %v1244
    %v1250 = vpack.c.b16 %v1246, %v1246
    %vm1251 = vcmask 523264
    %v1253 = vsel %vm1251, %v1247, 0
    %v1256 = vsel %vm1251, %v1248, 0
    %v1259 = vsel %vm1251, %v1249, 0
    %v1262 = vsel %vm1251, %v1250, 0
    %1264 = vmatprep.subr.bf16.mxu0 %v1214
    %1265 = vmatpush1.bf16.msra.mxu0 %v1213
    %1266 = vmatprep.subr.bf16.mxu0 %v1219
    %1267 = vmatpush1.bf16.msra.mxu0 %v1218
    %1268 = vmatprep.subr.bf16.mxu0 %v1224
    %1269 = vmatpush1.bf16.msra.mxu0 %v1223
    %1270 = vmatprep.subr.bf16.mxu0 %v1229
    %1271 = vmatpush1.bf16.msra.mxu0 %v1228
    %1272 = vmatprep.subr.bf16.mxu0 0
    %1273 = vmatpush1.bf16.msra.mxu0 0
    %1274 = vmatprep.subr.bf16.mxu0 0
    %1275 = vmatpush1.bf16.msra.mxu0 0
    %1276 = vmatprep.subr.bf16.mxu0 0
    %1277 = vmatpush1.bf16.msra.mxu0 0
    %1278 = vmatprep.subr.bf16.mxu0 0
    %1279 = vmatpush1.bf16.msra.mxu0 0
    %1280 = vmatprep.subr.bf16.mxu0 0
    %1281 = vmatpush1.bf16.msra.mxu0 0
    %1282 = vmatprep.subr.bf16.mxu0 0
    %1283 = vmatpush1.bf16.msra.mxu0 0
    %1284 = vmatprep.subr.bf16.mxu0 0
    %1285 = vmatpush1.bf16.msra.mxu0 0
    %1286 = vmatprep.subr.bf16.mxu0 0
    %1287 = vmatpush1.bf16.msra.mxu0 0
    %1288 = vmatprep.subr.bf16.mxu0 0
    %1289 = vmatpush1.bf16.msra.mxu0 0
    %1290 = vmatprep.subr.bf16.mxu0 0
    %1291 = vmatpush1.bf16.msra.mxu0 0
    %1292 = vmatprep.subr.bf16.mxu0 0
    %1293 = vmatpush1.bf16.msra.mxu0 0
    %1294 = vmatprep.subr.bf16.mxu0 0
    %1295 = vmatpush1.bf16.msra.mxu0 0
    %1296 = vmatprep.mubr.bf16.mxu0 0
    %1297 = vmatmul.mubr.bf16.gmra.mrb[0].mxu0 %v1253
    %v1298 = vpop.f32.mrb[0].mxu0
    %v1299 = vadd.f32 0.0, %v1298
    %v1300 = vpop.f32.mrb[0].mxu0
    %v1301 = vadd.f32 0.0, %v1300
    %v1302 = vpop.f32.mrb[0].mxu0
    %v1303 = vadd.f32 0.0, %v1302
    %v1304 = vpop.f32.mrb[0].mxu0
    %v1305 = vadd.f32 0.0, %v1304
    %1306 = vmatprep.mubr.bf16.mxu0 0
    %1307 = vmatmul.mubr.bf16.gmra.mrb[0].mxu0 %v1256
    %v1308 = vpop.f32.mrb[0].mxu0
    %v1309 = vadd.f32 0.0, %v1308
    %v1310 = vpop.f32.mrb[0].mxu0
    %v1311 = vadd.f32 0.0, %v1310
    %v1312 = vpop.f32.mrb[0].mxu0
    %v1313 = vadd.f32 0.0, %v1312
    %v1314 = vpop.f32.mrb[0].mxu0
    %v1315 = vadd.f32 0.0, %v1314
    %1316 = vmatprep.mubr.bf16.mxu0 0
    %1317 = vmatmul.mubr.bf16.gmra.mrb[0].mxu0 %v1259
    %v1318 = vpop.f32.mrb[0].mxu0
    %v1319 = vadd.f32 0.0, %v1318
    %v1320 = vpop.f32.mrb[0].mxu0
    %v1321 = vadd.f32 0.0, %v1320
    %v1322 = vpop.f32.mrb[0].mxu0
    %v1323 = vadd.f32 0.0, %v1322
    %v1324 = vpop.f32.mrb[0].mxu0
    %v1325 = vadd.f32 0.0, %v1324
    %1326 = vmatprep.mubr.bf16.mxu0 0
    %1327 = vmatmul.mubr.bf16.gmra.mrb[0].mxu0 %v1262
    %v1328 = vpop.f32.mrb[0].mxu0
    %v1329 = vadd.f32 0.0, %v1328
    %v1330 = vpop.f32.mrb[0].mxu0
    %v1331 = vadd.f32 0.0, %v1330
    %v1332 = vpop.f32.mrb[0].mxu0
    %v1333 = vpop.f32.mrb[0].mxu0
    %1334 = vdwg.mxu0
    %1335 = vmatprep.subr.bf16.mxu0 %v1216
    %1336 = vmatpush1.bf16.msra.mxu0 %v1215
    %1337 = vmatprep.subr.bf16.mxu0 %v1221
    %1338 = vmatpush1.bf16.msra.mxu0 %v1220
    %1339 = vmatprep.subr.bf16.mxu0 %v1226
    %1340 = vmatpush1.bf16.msra.mxu0 %v1225
    %1341 = vmatprep.subr.bf16.mxu0 %v1231
    %1342 = vmatpush1.bf16.msra.mxu0 %v1230
    %1343 = vmatprep.subr.bf16.mxu0 0
    %1344 = vmatpush1.bf16.msra.mxu0 0
    %1345 = vmatprep.subr.bf16.mxu0 0
    %1346 = vmatpush1.bf16.msra.mxu0 0
    %1347 = vmatprep.subr.bf16.mxu0 0
    %1348 = vmatpush1.bf16.msra.mxu0 0
    %1349 = vmatprep.subr.bf16.mxu0 0
    %1350 = vmatpush1.bf16.msra.mxu0 0
    %1351 = vmatprep.subr.bf16.mxu0 0
    %1352 = vmatpush1.bf16.msra.mxu0 0
    %1353 = vmatprep.subr.bf16.mxu0 0
    %1354 = vmatpush1.bf16.msra.mxu0 0
    %1355 = vmatprep.subr.bf16.mxu0 0
    %1356 = vmatpush1.bf16.msra.mxu0 0
    %1357 = vmatprep.subr.bf16.mxu0 0
    %1358 = vmatpush1.bf16.msra.mxu0 0
    %1359 = vmatprep.subr.bf16.mxu0 0
    %1360 = vmatpush1.bf16.msra.mxu0 0
    %1361 = vmatprep.subr.bf16.mxu0 0
    %1362 = vmatpush1.bf16.msra.mxu0 0
    %1363 = vmatprep.subr.bf16.mxu0 0
    %1364 = vmatpush1.bf16.msra.mxu0 0
    %1365 = vmatprep.subr.bf16.mxu0 0
    %1366 = vmatpush1.bf16.msra.mxu0 0
    %1367 = vmatprep.mubr.bf16.mxu0 0
    %1368 = vmatmul.mubr.bf16.gmra.mrb[0].mxu0 %v1253
    %v1369 = vpop.f32.mrb[0].mxu0
    %v1370 = vadd.f32 0.0, %v1369
    %v1371 = vpop.f32.mrb[0].mxu0
    %v1372 = vadd.f32 0.0, %v1371
    %v1373 = vpop.f32.mrb[0].mxu0
    %v1374 = vadd.f32 0.0, %v1373
    %v1375 = vpop.f32.mrb[0].mxu0
    %v1376 = vadd.f32 0.0, %v1375
    %1377 = vmatprep.mubr.bf16.mxu0 0
    %1378 = vmatmul.mubr.bf16.gmra.mrb[0].mxu0 %v1256
    %v1379 = vpop.f32.mrb[0].mxu0
    %v1380 = vadd.f32 0.0, %v1379
    %v1381 = vpop.f32.mrb[0].mxu0
    %v1382 = vadd.f32 0.0, %v1381
    %v1383 = vpop.f32.mrb[0].mxu0
    %v1384 = vadd.f32 0.0, %v1383
    %v1385 = vpop.f32.mrb[0].mxu0
    %v1386 = vadd.f32 0.0, %v1385
    %1387 = vmatprep.mubr.bf16.mxu0 0
    %1388 = vmatmul.mubr.bf16.gmra.mrb[0].mxu0 %v1259
    %v1389 = vpop.f32.mrb[0].mxu0
    %v1390 = vadd.f32 0.0, %v1389
    %v1391 = vpop.f32.mrb[0].mxu0
    %v1392 = vadd.f32 0.0, %v1391
    %v1393 = vpop.f32.mrb[0].mxu0
    %v1394 = vadd.f32 0.0, %v1393
    %v1395 = vpop.f32.mrb[0].mxu0
    %v1396 = vadd.f32 0.0, %v1395
    %1397 = vmatprep.mubr.bf16.mxu0 0
    %1398 = vmatmul.mubr.bf16.gmra.mrb[0].mxu0 %v1262
    %v1399 = vpop.f32.mrb[0].mxu0
    %v1400 = vadd.f32 0.0, %v1399
    %v1401 = vpop.f32.mrb[0].mxu0
    %v1402 = vadd.f32 0.0, %v1401
    %v1403 = vpop.f32.mrb[0].mxu0
    %v1404 = vpop.f32.mrb[0].mxu0
    %1405 = vdwg.mxu0
    %1406 = vmatprep.subr.bf16.mxu0 0
    %1407 = vmatpush1.bf16.msra.mxu0 %v1217
    %1408 = vmatprep.subr.bf16.mxu0 0
    %1409 = vmatpush1.bf16.msra.mxu0 %v1222
    %1410 = vmatprep.subr.bf16.mxu0 0
    %1411 = vmatpush1.bf16.msra.mxu0 %v1227
    %1412 = vmatprep.subr.bf16.mxu0 0
    %1413 = vmatpush1.bf16.msra.mxu0 %v1232
    %1414 = vmatprep.subr.bf16.mxu0 0
    %1415 = vmatpush1.bf16.msra.mxu0 0
    %1416 = vmatprep.subr.bf16.mxu0 0
    %1417 = vmatpush1.bf16.msra.mxu0 0
    %1418 = vmatprep.subr.bf16.mxu0 0
    %1419 = vmatpush1.bf16.msra.mxu0 0
    %1420 = vmatprep.subr.bf16.mxu0 0
    %1421 = vmatpush1.bf16.msra.mxu0 0
    %1422 = vmatprep.subr.bf16.mxu0 0
    %1423 = vmatpush1.bf16.msra.mxu0 0
    %1424 = vmatprep.subr.bf16.mxu0 0
    %1425 = vmatpush1.bf16.msra.mxu0 0
    %1426 = vmatprep.subr.bf16.mxu0 0
    %1427 = vmatpush1.bf16.msra.mxu0 0
    %1428 = vmatprep.subr.bf16.mxu0 0
    %1429 = vmatpush1.bf16.msra.mxu0 0
    %1430 = vmatprep.subr.bf16.mxu0 0
    %1431 = vmatpush1.bf16.msra.mxu0 0
    %1432 = vmatprep.subr.bf16.mxu0 0
    %1433 = vmatpush1.bf16.msra.mxu0 0
    %1434 = vmatprep.subr.bf16.mxu0 0
    %1435 = vmatpush1.bf16.msra.mxu0 0
    %1436 = vmatprep.subr.bf16.mxu0 0
    %1437 = vmatpush1.bf16.msra.mxu0 0
    %1438 = vmatprep.mubr.bf16.mxu0 0
    %1439 = vmatmul.mubr.bf16.gmra.mrb[0].mxu0 %v1253
    %v1440 = vpop.f32.mrb[0].mxu0
    %v1441 = vadd.f32 0.0, %v1440
    %v1442 = vpop.f32.mrb[0].mxu0
    %v1443 = vpop.f32.mrb[0].mxu0
    %v1444 = vadd.f32 0.0, %v1443
    %v1445 = vpop.f32.mrb[0].mxu0
    %1446 = vmatprep.mubr.bf16.mxu0 0
    %1447 = vmatmul.mubr.bf16.gmra.mrb[0].mxu0 %v1256
    %v1448 = vpop.f32.mrb[0].mxu0
    %v1449 = vadd.f32 0.0, %v1448
    %v1450 = vpop.f32.mrb[0].mxu0
    %v1451 = vpop.f32.mrb[0].mxu0
    %v1452 = vadd.f32 0.0, %v1451
    %v1453 = vpop.f32.mrb[0].mxu0
    %1454 = vmatprep.mubr.bf16.mxu0 0
    %1455 = vmatmul.mubr.bf16.gmra.mrb[0].mxu0 %v1259
    %v1456 = vpop.f32.mrb[0].mxu0
    %v1457 = vadd.f32 0.0, %v1456
    %v1458 = vpop.f32.mrb[0].mxu0
    %v1459 = vpop.f32.mrb[0].mxu0
    %v1460 = vadd.f32 0.0, %v1459
    %v1461 = vpop.f32.mrb[0].mxu0
    %1462 = vmatprep.mubr.bf16.mxu0 0
    %1463 = vmatmul.mubr.bf16.gmra.mrb[0].mxu0 %v1262
    %v1464 = vpop.f32.mrb[0].mxu0
    %v1465 = vadd.f32 0.0, %v1464
    %v1466 = vpop.f32.mrb[0].mxu0
    %v1467 = vpop.f32.mrb[0].mxu0
    %v1468 = vpop.f32.mrb[0].mxu0
    %1469 = vdwg.mxu0
    %v1470 = vmul.f32 %v1299, 10.0
    %v1471 = vmul.f32 %v1301, 10.0
    %v1472 = vmul.f32 %v1370, 10.0
    %v1473 = vmul.f32 %v1372, 10.0
    %v1474 = vmul.f32 %v1441, 10.0
    %v1475 = vmul.f32 %v1303, 10.0
    %v1476 = vmul.f32 %v1305, 10.0
    %v1477 = vmul.f32 %v1374, 10.0
    %v1478 = vmul.f32 %v1376, 10.0
    %v1479 = vmul.f32 %v1444, 10.0
    %v1480 = vmul.f32 %v1309, 10.0
    %v1481 = vmul.f32 %v1311, 10.0
    %v1482 = vmul.f32 %v1380, 10.0
    %v1483 = vmul.f32 %v1382, 10.0
    %v1484 = vmul.f32 %v1449, 10.0
    %v1485 = vmul.f32 %v1313, 10.0
    %v1486 = vmul.f32 %v1315, 10.0
    %v1487 = vmul.f32 %v1384, 10.0
    %v1488 = vmul.f32 %v1386, 10.0
    %v1489 = vmul.f32 %v1452, 10.0
    %v1490 = vmul.f32 %v1319, 10.0
    %v1491 = vmul.f32 %v1321, 10.0
    %v1492 = vmul.f32 %v1390, 10.0
    %v1493 = vmul.f32 %v1392, 10.0
    %v1494 = vmul.f32 %v1457, 10.0
    %v1495 = vmul.f32 %v1323, 10.0
    %v1496 = vmul.f32 %v1325, 10.0
    %v1497 = vmul.f32 %v1394, 10.0
    %v1498 = vmul.f32 %v1396, 10.0
    %v1499 = vmul.f32 %v1460, 10.0
    %v1500 = vmul.f32 %v1329, 10.0
    %v1501 = vmul.f32 %v1331, 10.0
    %v1502 = vmul.f32 %v1400, 10.0
    %v1503 = vmul.f32 %v1402, 10.0
    %v1504 = vmul.f32 %v1465, 10.0
    %v1505 = vmin.f32 %v1470, 20.0
    %v1506 = vmin.f32 %v1471, 20.0
    %v1507 = vmin.f32 %v1472, 20.0
    %v1508 = vmin.f32 %v1473, 20.0
    %v1509 = vmin.f32 %v1474, 20.0
    %v1510 = vmin.f32 %v1475, 20.0
    %v1511 = vmin.f32 %v1476, 20.0
    %v1512 = vmin.f32 %v1477, 20.0
    %v1513 = vmin.f32 %v1478, 20.0
    %v1514 = vmin.f32 %v1479, 20.0
    %v1515 = vmin.f32 %v1480, 20.0
    %v1516 = vmin.f32 %v1481, 20.0
    %v1517 = vmin.f32 %v1482, 20.0
    %v1518 = vmin.f32 %v1483, 20.0
    %v1519 = vmin.f32 %v1484, 20.0
    %v1520 = vmin.f32 %v1485, 20.0
    %v1521 = vmin.f32 %v1486, 20.0
    %v1522 = vmin.f32 %v1487, 20.0
    %v1523 = vmin.f32 %v1488, 20.0
    %v1524 = vmin.f32 %v1489, 20.0
    %v1525 = vmin.f32 %v1490, 20.0
    %v1526 = vmin.f32 %v1491, 20.0
    %v1527 = vmin.f32 %v1492, 20.0
    %v1528 = vmin.f32 %v1493, 20.0
    %v1529 = vmin.f32 %v1494, 20.0
    %v1530 = vmin.f32 %v1495, 20.0
    %v1531 = vmin.f32 %v1496, 20.0
    %v1532 = vmin.f32 %v1497, 20.0
    %v1533 = vmin.f32 %v1498, 20.0
    %v1534 = vmin.f32 %v1499, 20.0
    %v1535 = vmin.f32 %v1500, 20.0
    %v1536 = vmin.f32 %v1501, 20.0
    %v1537 = vmin.f32 %v1502, 20.0
    %v1538 = vmin.f32 %v1503, 20.0
    %v1539 = vmin.f32 %v1504, 20.0
    %v1540 = vmul.f32 %v1505, 1.442695
    %v1541 = vpow.pop %v1540
    %v1542 = vmul.f32 %v1506, 1.442695
    %v1543 = vpow.pop %v1542
    %v1544 = vmul.f32 %v1507, 1.442695
    %v1545 = vpow.pop %v1544
    %v1546 = vmul.f32 %v1508, 1.442695
    %v1547 = vpow.pop %v1546
    %v1548 = vmul.f32 %v1509, 1.442695
    %v1549 = vpow.pop %v1548
    %v1550 = vmul.f32 %v1510, 1.442695
    %v1551 = vpow.pop %v1550
    %v1552 = vmul.f32 %v1511, 1.442695
    %v1553 = vpow.pop %v1552
    %v1554 = vmul.f32 %v1512, 1.442695
    %v1555 = vpow.pop %v1554
    %v1556 = vmul.f32 %v1513, 1.442695
    %v1557 = vpow.pop %v1556
    %v1558 = vmul.f32 %v1514, 1.442695
    %v1559 = vpow.pop %v1558
    %v1560 = vmul.f32 %v1515, 1.442695
    %v1561 = vpow.pop %v1560
    %v1562 = vmul.f32 %v1516, 1.442695
    %v1563 = vpow.pop %v1562
    %v1564 = vmul.f32 %v1517, 1.442695
    %v1565 = vpow.pop %v1564
    %v1566 = vmul.f32 %v1518, 1.442695
    %v1567 = vpow.pop %v1566
    %v1568 = vmul.f32 %v1519, 1.442695
    %v1569 = vpow.pop %v1568
    %v1570 = vmul.f32 %v1520, 1.442695
    %v1571 = vpow.pop %v1570
    %v1572 = vmul.f32 %v1521, 1.442695
    %v1573 = vpow.pop %v1572
    %v1574 = vmul.f32 %v1522, 1.442695
    %v1575 = vpow.pop %v1574
    %v1576 = vmul.f32 %v1523, 1.442695
    %v1577 = vpow.pop %v1576
    %v1578 = vmul.f32 %v1524, 1.442695
    %v1579 = vpow.pop %v1578
    %v1580 = vmul.f32 %v1525, 1.442695
    %v1581 = vpow.pop %v1580
    %v1582 = vmul.f32 %v1526, 1.442695
    %v1583 = vpow.pop %v1582
    %v1584 = vmul.f32 %v1527, 1.442695
    %v1585 = vpow.pop %v1584
    %v1586 = vmul.f32 %v1528, 1.442695
    %v1587 = vpow.pop %v1586
    %v1588 = vmul.f32 %v1529, 1.442695
    %v1589 = vpow.pop %v1588
    %v1590 = vmul.f32 %v1530, 1.442695
    %v1591 = vpow.pop %v1590
    %v1592 = vmul.f32 %v1531, 1.442695
    %v1593 = vpow.pop %v1592
    %v1594 = vmul.f32 %v1532, 1.442695
    %v1595 = vpow.pop %v1594
    %v1596 = vmul.f32 %v1533, 1.442695
    %v1597 = vpow.pop %v1596
    %v1598 = vmul.f32 %v1534, 1.442695
    %v1599 = vpow.pop %v1598
    %v1600 = vmul.f32 %v1535, 1.442695
    %v1601 = vpow.pop %v1600
    %v1602 = vmul.f32 %v1536, 1.442695
    %v1603 = vpow.pop %v1602
    %v1604 = vmul.f32 %v1537, 1.442695
    %v1605 = vpow.pop %v1604
    %v1606 = vmul.f32 %v1538, 1.442695
    %v1607 = vpow.pop %v1606
    %v1608 = vmul.f32 %v1539, 1.442695
    %v1609 = vpow.pop %v1608
    %v1610 = vadd.f32 %v1541, 1.0
    %v1611 = vlog2.pop %v1610
    %v1612 = vmul.f32 %v1611, 0.6931472
    %v1613 = vmul.f32 -0.5, %v1541
    %v1614 = vadd.f32 %v1613, 1.0
    %v1615 = vmul.f32 %v1614, %v1541
    %v1616 = vand.u32 2147483647, %v1541
    %vm1617 = vcmp.lt.f32.partialorder %v1616, 0.0004427343
    %v1618 = vsel %vm1617, %v1615, %v1612
    %v1619 = vadd.f32 %v1543, 1.0
    %v1620 = vlog2.pop %v1619
    %v1621 = vmul.f32 %v1620, 0.6931472
    %v1622 = vmul.f32 -0.5, %v1543
    %v1623 = vadd.f32 %v1622, 1.0
    %v1624 = vmul.f32 %v1623, %v1543
    %v1625 = vand.u32 2147483647, %v1543
    %vm1626 = vcmp.lt.f32.partialorder %v1625, 0.0004427343
    %v1627 = vsel %vm1626, %v1624, %v1621
    %v1628 = vadd.f32 %v1545, 1.0
    %v1629 = vlog2.pop %v1628
    %v1630 = vmul.f32 %v1629, 0.6931472
    %v1631 = vmul.f32 -0.5, %v1545
    %v1632 = vadd.f32 %v1631, 1.0
    %v1633 = vmul.f32 %v1632, %v1545
    %v1634 = vand.u32 2147483647, %v1545
    %vm1635 = vcmp.lt.f32.partialorder %v1634, 0.0004427343
    %v1636 = vsel %vm1635, %v1633, %v1630
    %v1637 = vadd.f32 %v1547, 1.0
    %v1638 = vlog2.pop %v1637
    %v1639 = vmul.f32 %v1638, 0.6931472
    %v1640 = vmul.f32 -0.5, %v1547
    %v1641 = vadd.f32 %v1640, 1.0
    %v1642 = vmul.f32 %v1641, %v1547
    %v1643 = vand.u32 2147483647, %v1547
    %vm1644 = vcmp.lt.f32.partialorder %v1643, 0.0004427343
    %v1645 = vsel %vm1644, %v1642, %v1639
    %v1646 = vadd.f32 %v1549, 1.0
    %v1647 = vlog2.pop %v1646
    %v1648 = vmul.f32 %v1647, 0.6931472
    %v1649 = vmul.f32 -0.5, %v1549
    %v1650 = vadd.f32 %v1649, 1.0
    %v1651 = vmul.f32 %v1650, %v1549
    %v1652 = vand.u32 2147483647, %v1549
    %vm1653 = vcmp.lt.f32.partialorder %v1652, 0.0004427343
    %v1654 = vsel %vm1653, %v1651, %v1648
    %v1655 = vadd.f32 %v1551, 1.0
    %v1656 = vlog2.pop %v1655
    %v1657 = vmul.f32 %v1656, 0.6931472
    %v1658 = vmul.f32 -0.5, %v1551
    %v1659 = vadd.f32 %v1658, 1.0
    %v1660 = vmul.f32 %v1659, %v1551
    %v1661 = vand.u32 2147483647, %v1551
    %vm1662 = vcmp.lt.f32.partialorder %v1661, 0.0004427343
    %v1663 = vsel %vm1662, %v1660, %v1657
    %v1664 = vadd.f32 %v1553, 1.0
    %v1665 = vlog2.pop %v1664
    %v1666 = vmul.f32 %v1665, 0.6931472
    %v1667 = vmul.f32 -0.5, %v1553
    %v1668 = vadd.f32 %v1667, 1.0
    %v1669 = vmul.f32 %v1668, %v1553
    %v1670 = vand.u32 2147483647, %v1553
    %vm1671 = vcmp.lt.f32.partialorder %v1670, 0.0004427343
    %v1672 = vsel %vm1671, %v1669, %v1666
    %v1673 = vadd.f32 %v1555, 1.0
    %v1674 = vlog2.pop %v1673
    %v1675 = vmul.f32 %v1674, 0.6931472
    %v1676 = vmul.f32 -0.5, %v1555
    %v1677 = vadd.f32 %v1676, 1.0
    %v1678 = vmul.f32 %v1677, %v1555
    %v1679 = vand.u32 2147483647, %v1555
    %vm1680 = vcmp.lt.f32.partialorder %v1679, 0.0004427343
    %v1681 = vsel %vm1680, %v1678, %v1675
    %v1682 = vadd.f32 %v1557, 1.0
    %v1683 = vlog2.pop %v1682
    %v1684 = vmul.f32 %v1683, 0.6931472
    %v1685 = vmul.f32 -0.5, %v1557
    %v1686 = vadd.f32 %v1685, 1.0
    %v1687 = vmul.f32 %v1686, %v1557
    %v1688 = vand.u32 2147483647, %v1557
    %vm1689 = vcmp.lt.f32.partialorder %v1688, 0.0004427343
    %v1690 = vsel %vm1689, %v1687, %v1684
    %v1691 = vadd.f32 %v1559, 1.0
    %v1692 = vlog2.pop %v1691
    %v1693 = vmul.f32 %v1692, 0.6931472
    %v1694 = vmul.f32 -0.5, %v1559
    %v1695 = vadd.f32 %v1694, 1.0
    %v1696 = vmul.f32 %v1695, %v1559
    %v1697 = vand.u32 2147483647, %v1559
    %vm1698 = vcmp.lt.f32.partialorder %v1697, 0.0004427343
    %v1699 = vsel %vm1698, %v1696, %v1693
    %v1700 = vadd.f32 %v1561, 1.0
    %v1701 = vlog2.pop %v1700
    %v1702 = vmul.f32 %v1701, 0.6931472
    %v1703 = vmul.f32 -0.5, %v1561
    %v1704 = vadd.f32 %v1703, 1.0
    %v1705 = vmul.f32 %v1704, %v1561
    %v1706 = vand.u32 2147483647, %v1561
    %vm1707 = vcmp.lt.f32.partialorder %v1706, 0.0004427343
    %v1708 = vsel %vm1707, %v1705, %v1702
    %v1709 = vadd.f32 %v1563, 1.0
    %v1710 = vlog2.pop %v1709
    %v1711 = vmul.f32 %v1710, 0.6931472
    %v1712 = vmul.f32 -0.5, %v1563
    %v1713 = vadd.f32 %v1712, 1.0
    %v1714 = vmul.f32 %v1713, %v1563
    %v1715 = vand.u32 2147483647, %v1563
    %vm1716 = vcmp.lt.f32.partialorder %v1715, 0.0004427343
    %v1717 = vsel %vm1716, %v1714, %v1711
    %v1718 = vadd.f32 %v1565, 1.0
    %v1719 = vlog2.pop %v1718
    %v1720 = vmul.f32 %v1719, 0.6931472
    %v1721 = vmul.f32 -0.5, %v1565
    %v1722 = vadd.f32 %v1721, 1.0
    %v1723 = vmul.f32 %v1722, %v1565
    %v1724 = vand.u32 2147483647, %v1565
    %vm1725 = vcmp.lt.f32.partialorder %v1724, 0.0004427343
    %v1726 = vsel %vm1725, %v1723, %v1720
    %v1727 = vadd.f32 %v1567, 1.0
    %v1728 = vlog2.pop %v1727
    %v1729 = vmul.f32 %v1728, 0.6931472
    %v1730 = vmul.f32 -0.5, %v1567
    %v1731 = vadd.f32 %v1730, 1.0
    %v1732 = vmul.f32 %v1731, %v1567
    %v1733 = vand.u32 2147483647, %v1567
    %vm1734 = vcmp.lt.f32.partialorder %v1733, 0.0004427343
    %v1735 = vsel %vm1734, %v1732, %v1729
    %v1736 = vadd.f32 %v1569, 1.0
    %v1737 = vlog2.pop %v1736
    %v1738 = vmul.f32 %v1737, 0.6931472
    %v1739 = vmul.f32 -0.5, %v1569
    %v1740 = vadd.f32 %v1739, 1.0
    %v1741 = vmul.f32 %v1740, %v1569
    %v1742 = vand.u32 2147483647, %v1569
    %vm1743 = vcmp.lt.f32.partialorder %v1742, 0.0004427343
    %v1744 = vsel %vm1743, %v1741, %v1738
    %v1745 = vadd.f32 %v1571, 1.0
    %v1746 = vlog2.pop %v1745
    %v1747 = vmul.f32 %v1746, 0.6931472
    %v1748 = vmul.f32 -0.5, %v1571
    %v1749 = vadd.f32 %v1748, 1.0
    %v1750 = vmul.f32 %v1749, %v1571
    %v1751 = vand.u32 2147483647, %v1571
    %vm1752 = vcmp.lt.f32.partialorder %v1751, 0.0004427343
    %v1753 = vsel %vm1752, %v1750, %v1747
    %v1754 = vadd.f32 %v1573, 1.0
    %v1755 = vlog2.pop %v1754
    %v1756 = vmul.f32 %v1755, 0.6931472
    %v1757 = vmul.f32 -0.5, %v1573
    %v1758 = vadd.f32 %v1757, 1.0
    %v1759 = vmul.f32 %v1758, %v1573
    %v1760 = vand.u32 2147483647, %v1573
    %vm1761 = vcmp.lt.f32.partialorder %v1760, 0.0004427343
    %v1762 = vsel %vm1761, %v1759, %v1756
    %v1763 = vadd.f32 %v1575, 1.0
    %v1764 = vlog2.pop %v1763
    %v1765 = vmul.f32 %v1764, 0.6931472
    %v1766 = vmul.f32 -0.5, %v1575
    %v1767 = vadd.f32 %v1766, 1.0
    %v1768 = vmul.f32 %v1767, %v1575
    %v1769 = vand.u32 2147483647, %v1575
    %vm1770 = vcmp.lt.f32.partialorder %v1769, 0.0004427343
    %v1771 = vsel %vm1770, %v1768, %v1765
    %v1772 = vadd.f32 %v1577, 1.0
    %v1773 = vlog2.pop %v1772
    %v1774 = vmul.f32 %v1773, 0.6931472
    %v1775 = vmul.f32 -0.5, %v1577
    %v1776 = vadd.f32 %v1775, 1.0
    %v1777 = vmul.f32 %v1776, %v1577
    %v1778 = vand.u32 2147483647, %v1577
    %vm1779 = vcmp.lt.f32.partialorder %v1778, 0.0004427343
    %v1780 = vsel %vm1779, %v1777, %v1774
    %v1781 = vadd.f32 %v1579, 1.0
    %v1782 = vlog2.pop %v1781
    %v1783 = vmul.f32 %v1782, 0.6931472
    %v1784 = vmul.f32 -0.5, %v1579
    %v1785 = vadd.f32 %v1784, 1.0
    %v1786 = vmul.f32 %v1785, %v1579
    %v1787 = vand.u32 2147483647, %v1579
    %vm1788 = vcmp.lt.f32.partialorder %v1787, 0.0004427343
    %v1789 = vsel %vm1788, %v1786, %v1783
    %v1790 = vadd.f32 %v1581, 1.0
    %v1791 = vlog2.pop %v1790
    %v1792 = vmul.f32 %v1791, 0.6931472
    %v1793 = vmul.f32 -0.5, %v1581
    %v1794 = vadd.f32 %v1793, 1.0
    %v1795 = vmul.f32 %v1794, %v1581
    %v1796 = vand.u32 2147483647, %v1581
    %vm1797 = vcmp.lt.f32.partialorder %v1796, 0.0004427343
    %v1798 = vsel %vm1797, %v1795, %v1792
    %v1799 = vadd.f32 %v1583, 1.0
    %v1800 = vlog2.pop %v1799
    %v1801 = vmul.f32 %v1800, 0.6931472
    %v1802 = vmul.f32 -0.5, %v1583
    %v1803 = vadd.f32 %v1802, 1.0
    %v1804 = vmul.f32 %v1803, %v1583
    %v1805 = vand.u32 2147483647, %v1583
    %vm1806 = vcmp.lt.f32.partialorder %v1805, 0.0004427343
    %v1807 = vsel %vm1806, %v1804, %v1801
    %v1808 = vadd.f32 %v1585, 1.0
    %v1809 = vlog2.pop %v1808
    %v1810 = vmul.f32 %v1809, 0.6931472
    %v1811 = vmul.f32 -0.5, %v1585
    %v1812 = vadd.f32 %v1811, 1.0
    %v1813 = vmul.f32 %v1812, %v1585
    %v1814 = vand.u32 2147483647, %v1585
    %vm1815 = vcmp.lt.f32.partialorder %v1814, 0.0004427343
    %v1816 = vsel %vm1815, %v1813, %v1810
    %v1817 = vadd.f32 %v1587, 1.0
    %v1818 = vlog2.pop %v1817
    %v1819 = vmul.f32 %v1818, 0.6931472
    %v1820 = vmul.f32 -0.5, %v1587
    %v1821 = vadd.f32 %v1820, 1.0
    %v1822 = vmul.f32 %v1821, %v1587
    %v1823 = vand.u32 2147483647, %v1587
    %vm1824 = vcmp.lt.f32.partialorder %v1823, 0.0004427343
    %v1825 = vsel %vm1824, %v1822, %v1819
    %v1826 = vadd.f32 %v1589, 1.0
    %v1827 = vlog2.pop %v1826
    %v1828 = vmul.f32 %v1827, 0.6931472
    %v1829 = vmul.f32 -0.5, %v1589
    %v1830 = vadd.f32 %v1829, 1.0
    %v1831 = vmul.f32 %v1830, %v1589
    %v1832 = vand.u32 2147483647, %v1589
    %vm1833 = vcmp.lt.f32.partialorder %v1832, 0.0004427343
    %v1834 = vsel %vm1833, %v1831, %v1828
    %v1835 = vadd.f32 %v1591, 1.0
    %v1836 = vlog2.pop %v1835
    %v1837 = vmul.f32 %v1836, 0.6931472
    %v1838 = vmul.f32 -0.5, %v1591
    %v1839 = vadd.f32 %v1838, 1.0
    %v1840 = vmul.f32 %v1839, %v1591
    %v1841 = vand.u32 2147483647, %v1591
    %vm1842 = vcmp.lt.f32.partialorder %v1841, 0.0004427343
    %v1843 = vsel %vm1842, %v1840, %v1837
    %v1844 = vadd.f32 %v1593, 1.0
    %v1845 = vlog2.pop %v1844
    %v1846 = vmul.f32 %v1845, 0.6931472
    %v1847 = vmul.f32 -0.5, %v1593
    %v1848 = vadd.f32 %v1847, 1.0
    %v1849 = vmul.f32 %v1848, %v1593
    %v1850 = vand.u32 2147483647, %v1593
    %vm1851 = vcmp.lt.f32.partialorder %v1850, 0.0004427343
    %v1852 = vsel %vm1851, %v1849, %v1846
    %v1853 = vadd.f32 %v1595, 1.0
    %v1854 = vlog2.pop %v1853
    %v1855 = vmul.f32 %v1854, 0.6931472
    %v1856 = vmul.f32 -0.5, %v1595
    %v1857 = vadd.f32 %v1856, 1.0
    %v1858 = vmul.f32 %v1857, %v1595
    %v1859 = vand.u32 2147483647, %v1595
    %vm1860 = vcmp.lt.f32.partialorder %v1859, 0.0004427343
    %v1861 = vsel %vm1860, %v1858, %v1855
    %v1862 = vadd.f32 %v1597, 1.0
    %v1863 = vlog2.pop %v1862
    %v1864 = vmul.f32 %v1863, 0.6931472
    %v1865 = vmul.f32 -0.5, %v1597
    %v1866 = vadd.f32 %v1865, 1.0
    %v1867 = vmul.f32 %v1866, %v1597
    %v1868 = vand.u32 2147483647, %v1597
    %vm1869 = vcmp.lt.f32.partialorder %v1868, 0.0004427343
    %v1870 = vsel %vm1869, %v1867, %v1864
    %v1871 = vadd.f32 %v1599, 1.0
    %v1872 = vlog2.pop %v1871
    %v1873 = vmul.f32 %v1872, 0.6931472
    %v1874 = vmul.f32 -0.5, %v1599
    %v1875 = vadd.f32 %v1874, 1.0
    %v1876 = vmul.f32 %v1875, %v1599
    %v1877 = vand.u32 2147483647, %v1599
    %vm1878 = vcmp.lt.f32.partialorder %v1877, 0.0004427343
    %v1879 = vsel %vm1878, %v1876, %v1873
    %v1880 = vadd.f32 %v1601, 1.0
    %v1881 = vlog2.pop %v1880
    %v1882 = vmul.f32 %v1881, 0.6931472
    %v1883 = vmul.f32 -0.5, %v1601
    %v1884 = vadd.f32 %v1883, 1.0
    %v1885 = vmul.f32 %v1884, %v1601
    %v1886 = vand.u32 2147483647, %v1601
    %vm1887 = vcmp.lt.f32.partialorder %v1886, 0.0004427343
    %v1888 = vsel %vm1887, %v1885, %v1882
    %v1889 = vadd.f32 %v1603, 1.0
    %v1890 = vlog2.pop %v1889
    %v1891 = vmul.f32 %v1890, 0.6931472
    %v1892 = vmul.f32 -0.5, %v1603
    %v1893 = vadd.f32 %v1892, 1.0
    %v1894 = vmul.f32 %v1893, %v1603
    %v1895 = vand.u32 2147483647, %v1603
    %vm1896 = vcmp.lt.f32.partialorder %v1895, 0.0004427343
    %v1897 = vsel %vm1896, %v1894, %v1891
    %v1898 = vadd.f32 %v1605, 1.0
    %v1899 = vlog2.pop %v1898
    %v1900 = vmul.f32 %v1899, 0.6931472
    %v1901 = vmul.f32 -0.5, %v1605
    %v1902 = vadd.f32 %v1901, 1.0
    %v1903 = vmul.f32 %v1902, %v1605
    %v1904 = vand.u32 2147483647, %v1605
    %vm1905 = vcmp.lt.f32.partialorder %v1904, 0.0004427343
    %v1906 = vsel %vm1905, %v1903, %v1900
    %v1907 = vadd.f32 %v1607, 1.0
    %v1908 = vlog2.pop %v1907
    %v1909 = vmul.f32 %v1908, 0.6931472
    %v1910 = vmul.f32 -0.5, %v1607
    %v1911 = vadd.f32 %v1910, 1.0
    %v1912 = vmul.f32 %v1911, %v1607
    %v1913 = vand.u32 2147483647, %v1607
    %vm1914 = vcmp.lt.f32.partialorder %v1913, 0.0004427343
    %v1915 = vsel %vm1914, %v1912, %v1909
    %v1916 = vadd.f32 %v1609, 1.0
    %v1917 = vlog2.pop %v1916
    %v1918 = vmul.f32 %v1917, 0.6931472
    %v1919 = vmul.f32 -0.5, %v1609
    %v1920 = vadd.f32 %v1919, 1.0
    %v1921 = vmul.f32 %v1920, %v1609
    %v1922 = vand.u32 2147483647, %v1609
    %vm1923 = vcmp.lt.f32.partialorder %v1922, 0.0004427343
    %v1924 = vsel %vm1923, %v1921, %v1918
    %v1925 = vmul.f32 %v1618, 0.1
    %v1926 = vmul.f32 %v1627, 0.1
    %v1927 = vmul.f32 %v1636, 0.1
    %v1928 = vmul.f32 %v1645, 0.1
    %v1929 = vmul.f32 %v1654, 0.1
    %v1930 = vmul.f32 %v1663, 0.1
    %v1931 = vmul.f32 %v1672, 0.1
    %v1932 = vmul.f32 %v1681, 0.1
    %v1933 = vmul.f32 %v1690, 0.1
    %v1934 = vmul.f32 %v1699, 0.1
    %v1935 = vmul.f32 %v1708, 0.1
    %v1936 = vmul.f32 %v1717, 0.1
    %v1937 = vmul.f32 %v1726, 0.1
    %v1938 = vmul.f32 %v1735, 0.1
    %v1939 = vmul.f32 %v1744, 0.1
    %v1940 = vmul.f32 %v1753, 0.1
    %v1941 = vmul.f32 %v1762, 0.1
    %v1942 = vmul.f32 %v1771, 0.1
    %v1943 = vmul.f32 %v1780, 0.1
    %v1944 = vmul.f32 %v1789, 0.1
    %v1945 = vmul.f32 %v1798, 0.1
    %v1946 = vmul.f32 %v1807, 0.1
    %v1947 = vmul.f32 %v1816, 0.1
    %v1948 = vmul.f32 %v1825, 0.1
    %v1949 = vmul.f32 %v1834, 0.1
    %v1950 = vmul.f32 %v1843, 0.1
    %v1951 = vmul.f32 %v1852, 0.1
    %v1952 = vmul.f32 %v1861, 0.1
    %v1953 = vmul.f32 %v1870, 0.1
    %v1954 = vmul.f32 %v1879, 0.1
    %v1955 = vmul.f32 %v1888, 0.1
    %v1956 = vmul.f32 %v1897, 0.1
    %v1957 = vmul.f32 %v1906, 0.1
    %v1958 = vmul.f32 %v1915, 0.1
    %v1959 = vmul.f32 %v1924, 0.1
    %vm1960 = vcmp.gt.f32.partialorder %v1470, 20.0
    %vm1961 = vcmp.gt.f32.partialorder %v1471, 20.0
    %vm1962 = vcmp.gt.f32.partialorder %v1472, 20.0
    %vm1963 = vcmp.gt.f32.partialorder %v1473, 20.0
    %vm1964 = vcmp.gt.f32.partialorder %v1474, 20.0
    %vm1965 = vcmp.gt.f32.partialorder %v1475, 20.0
    %vm1966 = vcmp.gt.f32.partialorder %v1476, 20.0
    %vm1967 = vcmp.gt.f32.partialorder %v1477, 20.0
    %vm1968 = vcmp.gt.f32.partialorder %v1478, 20.0
    %vm1969 = vcmp.gt.f32.partialorder %v1479, 20.0
    %vm1970 = vcmp.gt.f32.partialorder %v1480, 20.0
    %vm1971 = vcmp.gt.f32.partialorder %v1481, 20.0
    %vm1972 = vcmp.gt.f32.partialorder %v1482, 20.0
    %vm1973 = vcmp.gt.f32.partialorder %v1483, 20.0
    %vm1974 = vcmp.gt.f32.partialorder %v1484, 20.0
    %vm1975 = vcmp.gt.f32.partialorder %v1485, 20.0
    %vm1976 = vcmp.gt.f32.partialorder %v1486, 20.0
    %vm1977 = vcmp.gt.f32.partialorder %v1487, 20.0
    %vm1978 = vcmp.gt.f32.partialorder %v1488, 20.0
    %vm1979 = vcmp.gt.f32.partialorder %v1489, 20.0
    %vm1980 = vcmp.gt.f32.partialorder %v1490, 20.0
    %vm1981 = vcmp.gt.f32.partialorder %v1491, 20.0
    %vm1982 = vcmp.gt.f32.partialorder %v1492, 20.0
    %vm1983 = vcmp.gt.f32.partialorder %v1493, 20.0
    %vm1984 = vcmp.gt.f32.partialorder %v1494, 20.0
    %vm1985 = vcmp.gt.f32.partialorder %v1495, 20.0
    %vm1986 = vcmp.gt.f32.partialorder %v1496, 20.0
    %vm1987 = vcmp.gt.f32.partialorder %v1497, 20.0
    %vm1988 = vcmp.gt.f32.partialorder %v1498, 20.0
    %vm1989 = vcmp.gt.f32.partialorder %v1499, 20.0
    %vm1990 = vcmp.gt.f32.partialorder %v1500, 20.0
    %vm1991 = vcmp.gt.f32.partialorder %v1501, 20.0
    %vm1992 = vcmp.gt.f32.partialorder %v1502, 20.0
    %vm1993 = vcmp.gt.f32.partialorder %v1503, 20.0
    %vm1994 = vcmp.gt.f32.partialorder %v1504, 20.0
    %v1995 = vsel %vm1960, %v1299, %v1925
    %v1996 = vsel %vm1961, %v1301, %v1926
    %v1997 = vsel %vm1962, %v1370, %v1927
    %v1998 = vsel %vm1963, %v1372, %v1928
    %v1999 = vsel %vm1964, %v1441, %v1929
    %v2000 = vsel %vm1965, %v1303, %v1930
    %v2001 = vsel %vm1966, %v1305, %v1931
    %v2002 = vsel %vm1967, %v1374, %v1932
    %v2003 = vsel %vm1968, %v1376, %v1933
    %v2004 = vsel %vm1969, %v1444, %v1934
    %v2005 = vsel %vm1970, %v1309, %v1935
    %v2006 = vsel %vm1971, %v1311, %v1936
    %v2007 = vsel %vm1972, %v1380, %v1937
    %v2008 = vsel %vm1973, %v1382, %v1938
    %v2009 = vsel %vm1974, %v1449, %v1939
    %v2010 = vsel %vm1975, %v1313, %v1940
    %v2011 = vsel %vm1976, %v1315, %v1941
    %v2012 = vsel %vm1977, %v1384, %v1942
    %v2013 = vsel %vm1978, %v1386, %v1943
    %v2014 = vsel %vm1979, %v1452, %v1944
    %v2015 = vsel %vm1980, %v1319, %v1945
    %v2016 = vsel %vm1981, %v1321, %v1946
    %v2017 = vsel %vm1982, %v1390, %v1947
    %v2018 = vsel %vm1983, %v1392, %v1948
    %v2019 = vsel %vm1984, %v1457, %v1949
    %v2020 = vsel %vm1985, %v1323, %v1950
    %v2021 = vsel %vm1986, %v1325, %v1951
    %v2022 = vsel %vm1987, %v1394, %v1952
    %v2023 = vsel %vm1988, %v1396, %v1953
    %v2024 = vsel %vm1989, %v1460, %v1954
    %v2025 = vsel %vm1990, %v1329, %v1955
    %v2026 = vsel %vm1991, %v1331, %v1956
    %v2027 = vsel %vm1992, %v1400, %v1957
    %v2028 = vsel %vm1993, %v1402, %v1958
    %v2029 = vsel %vm1994, %v1465, %v1959
    %v2030 = vmul.f32 %v1995, 0.99
    %v2031 = vmul.f32 %v1996, 0.99
    %v2032 = vmul.f32 %v1997, 0.99
    %v2033 = vmul.f32 %v1998, 0.99
    %v2034 = vmul.f32 %v1999, 0.99
    %v2035 = vmul.f32 %v2000, 0.99
    %v2036 = vmul.f32 %v2001, 0.99
    %v2037 = vmul.f32 %v2002, 0.99
    %v2038 = vmul.f32 %v2003, 0.99
    %v2039 = vmul.f32 %v2004, 0.99
    %v2040 = vmul.f32 %v2005, 0.99
    %v2041 = vmul.f32 %v2006, 0.99
    %v2042 = vmul.f32 %v2007, 0.99
    %v2043 = vmul.f32 %v2008, 0.99
    %v2044 = vmul.f32 %v2009, 0.99
    %v2045 = vmul.f32 %v2010, 0.99
    %v2046 = vmul.f32 %v2011, 0.99
    %v2047 = vmul.f32 %v2012, 0.99
    %v2048 = vmul.f32 %v2013, 0.99
    %v2049 = vmul.f32 %v2014, 0.99
    %v2050 = vmul.f32 %v2015, 0.99
    %v2051 = vmul.f32 %v2016, 0.99
    %v2052 = vmul.f32 %v2017, 0.99
    %v2053 = vmul.f32 %v2018, 0.99
    %v2054 = vmul.f32 %v2019, 0.99
    %v2055 = vmul.f32 %v2020, 0.99
    %v2056 = vmul.f32 %v2021, 0.99
    %v2057 = vmul.f32 %v2022, 0.99
    %v2058 = vmul.f32 %v2023, 0.99
    %v2059 = vmul.f32 %v2024, 0.99
    %v2060 = vmul.f32 %v2025, 0.99
    %v2061 = vmul.f32 %v2026, 0.99
    %v2062 = vmul.f32 %v2027, 0.99
    %v2063 = vmul.f32 %v2028, 0.99
    %v2064 = vmul.f32 %v2029, 0.99
    %v2065 = vmul.f32 %v1299, 0.01
    %v2066 = vmul.f32 %v1301, 0.01
    %v2067 = vmul.f32 %v1370, 0.01
    %v2068 = vmul.f32 %v1372, 0.01
    %v2069 = vmul.f32 %v1441, 0.01
    %v2070 = vmul.f32 %v1303, 0.01
    %v2071 = vmul.f32 %v1305, 0.01
    %v2072 = vmul.f32 %v1374, 0.01
    %v2073 = vmul.f32 %v1376, 0.01
    %v2074 = vmul.f32 %v1444, 0.01
    %v2075 = vmul.f32 %v1309, 0.01
    %v2076 = vmul.f32 %v1311, 0.01
    %v2077 = vmul.f32 %v1380, 0.01
    %v2078 = vmul.f32 %v1382, 0.01
    %v2079 = vmul.f32 %v1449, 0.01
    %v2080 = vmul.f32 %v1313, 0.01
    %v2081 = vmul.f32 %v1315, 0.01
    %v2082 = vmul.f32 %v1384, 0.01
    %v2083 = vmul.f32 %v1386, 0.01
    %v2084 = vmul.f32 %v1452, 0.01
    %v2085 = vmul.f32 %v1319, 0.01
    %v2086 = vmul.f32 %v1321, 0.01
    %v2087 = vmul.f32 %v1390, 0.01
    %v2088 = vmul.f32 %v1392, 0.01
    %v2089 = vmul.f32 %v1457, 0.01
    %v2090 = vmul.f32 %v1323, 0.01
    %v2091 = vmul.f32 %v1325, 0.01
    %v2092 = vmul.f32 %v1394, 0.01
    %v2093 = vmul.f32 %v1396, 0.01
    %v2094 = vmul.f32 %v1460, 0.01
    %v2095 = vmul.f32 %v1329, 0.01
    %v2096 = vmul.f32 %v1331, 0.01
    %v2097 = vmul.f32 %v1400, 0.01
    %v2098 = vmul.f32 %v1402, 0.01
    %v2099 = vmul.f32 %v1465, 0.01
    %v2100 = vadd.f32 %v2030, %v2065
    %v2101 = vadd.f32 %v2031, %v2066
    %v2102 = vadd.f32 %v2032, %v2067
    %v2103 = vadd.f32 %v2033, %v2068
    %v2104 = vadd.f32 %v2034, %v2069
    %v2105 = vadd.f32 %v2035, %v2070
    %v2106 = vadd.f32 %v2036, %v2071
    %v2107 = vadd.f32 %v2037, %v2072
    %v2108 = vadd.f32 %v2038, %v2073
    %v2109 = vadd.f32 %v2039, %v2074
    %v2110 = vadd.f32 %v2040, %v2075
    %v2111 = vadd.f32 %v2041, %v2076
    %v2112 = vadd.f32 %v2042, %v2077
    %v2113 = vadd.f32 %v2043, %v2078
    %v2114 = vadd.f32 %v2044, %v2079
    %v2115 = vadd.f32 %v2045, %v2080
    %v2116 = vadd.f32 %v2046, %v2081
    %v2117 = vadd.f32 %v2047, %v2082
    %v2118 = vadd.f32 %v2048, %v2083
    %v2119 = vadd.f32 %v2049, %v2084
    %v2120 = vadd.f32 %v2050, %v2085
    %v2121 = vadd.f32 %v2051, %v2086
    %v2122 = vadd.f32 %v2052, %v2087
    %v2123 = vadd.f32 %v2053, %v2088
    %v2124 = vadd.f32 %v2054, %v2089
    %v2125 = vadd.f32 %v2055, %v2090
    %v2126 = vadd.f32 %v2056, %v2091
    %v2127 = vadd.f32 %v2057, %v2092
    %v2128 = vadd.f32 %v2058, %v2093
    %v2129 = vadd.f32 %v2059, %v2094
    %v2130 = vadd.f32 %v2060, %v2095
    %v2131 = vadd.f32 %v2061, %v2096
    %v2132 = vadd.f32 %v2062, %v2097
    %v2133 = vadd.f32 %v2063, %v2098
    %v2134 = vadd.f32 %v2064, %v2099
    %v2135 = vpack.c.bf16 %v2105, %v2100
    %v2136 = vpack.c.bf16 %v2106, %v2101
    %v2137 = vpack.c.bf16 %v2107, %v2102
    %v2138 = vpack.c.bf16 %v2108, %v2103
    %v2139 = vpack.c.bf16 %v2109, %v2104
    %v2140 = vpack.c.bf16 %v2115, %v2110
    %v2141 = vpack.c.bf16 %v2116, %v2111
    %v2142 = vpack.c.bf16 %v2117, %v2112
    %v2143 = vpack.c.bf16 %v2118, %v2113
    %v2144 = vpack.c.bf16 %v2119, %v2114
    %v2145 = vpack.c.bf16 %v2125, %v2120
    %v2146 = vpack.c.bf16 %v2126, %v2121
    %v2147 = vpack.c.bf16 %v2127, %v2122
    %v2148 = vpack.c.bf16 %v2128, %v2123
    %v2149 = vpack.c.bf16 %v2129, %v2124
    %v2150 = vpack.c.bf16 %v2130, %v2130
    %v2151 = vpack.c.bf16 %v2131, %v2131
    %v2152 = vpack.c.bf16 %v2132, %v2132
    %v2153 = vpack.c.bf16 %v2133, %v2133
    %v2154 = vpack.c.bf16 %v2134, %v2134
    %2155 = vst [vmem:[#allocation3] sm:$0xff] %v2135
    %2156 = vst [vmem:[#allocation3 + $0x8] sm:$0xff] %v2136
    %2157 = vst [vmem:[#allocation3 + $0x10] sm:$0xff] %v2137
    %2158 = vst [vmem:[#allocation3 + $0x18] sm:$0xff] %v2138
    %2159 = vst [vmem:[#allocation3 + $0x20] sm:$0xff] %v2139
    %2160 = vst [vmem:[#allocation3 + $0x28] sm:$0xff] %v2140
    %2161 = vst [vmem:[#allocation3 + $0x30] sm:$0xff] %v2141
    %2162 = vst [vmem:[#allocation3 + $0x38] sm:$0xff] %v2142
    %2163 = vst [vmem:[#allocation3 + $0x40] sm:$0xff] %v2143
    %2164 = vst [vmem:[#allocation3 + $0x48] sm:$0xff] %v2144
    %2165 = vst [vmem:[#allocation3 + $0x50] sm:$0xff] %v2145
    %2166 = vst [vmem:[#allocation3 + $0x58] sm:$0xff] %v2146
    %2167 = vst [vmem:[#allocation3 + $0x60] sm:$0xff] %v2147
    %2168 = vst [vmem:[#allocation3 + $0x68] sm:$0xff] %v2148
    %2169 = vst [vmem:[#allocation3 + $0x70] sm:$0xff] %v2149
    %2170 = vst [vmem:[#allocation3 + $0x78] sm:$0xf] %v2150
    %2171 = vst [vmem:[#allocation3 + $0x80] sm:$0xf] %v2151
    %2172 = vst [vmem:[#allocation3 + $0x88] sm:$0xf] %v2152
    %2173 = vst [vmem:[#allocation3 + $0x90] sm:$0xf] %v2153
    %2174 = vst [vmem:[#allocation3 + $0x98] sm:$0xf] %v2154
    %v2175 = vld [vmem:[%s3] sm:$0x1]
    %v2176 = vld [vmem:[#allocation3] sm:$0xff]
    %v2177 = vld [vmem:[#allocation3 + $0x8] sm:$0xff]
    %v2178 = vld [vmem:[#allocation3 + $0x10] sm:$0xff]
    %v2179 = vld [vmem:[#allocation3 + $0x18] sm:$0xff]
    %v2180 = vld [vmem:[#allocation3 + $0x20] sm:$0xff]
    %v2181 = vld [vmem:[#allocation3 + $0x28] sm:$0xff]
    %v2182 = vld [vmem:[#allocation3 + $0x30] sm:$0xff]
    %v2183 = vld [vmem:[#allocation3 + $0x38] sm:$0xff]
    %v2184 = vld [vmem:[#allocation3 + $0x40] sm:$0xff]
    %v2185 = vld [vmem:[#allocation3 + $0x48] sm:$0xff]
    %v2186 = vld [vmem:[#allocation3 + $0x50] sm:$0xff]
    %v2187 = vld [vmem:[#allocation3 + $0x58] sm:$0xff]
    %v2188 = vld [vmem:[#allocation3 + $0x60] sm:$0xff]
    %v2189 = vld [vmem:[#allocation3 + $0x68] sm:$0xff]
    %v2190 = vld [vmem:[#allocation3 + $0x70] sm:$0xff]
    %v2191 = vld [vmem:[#allocation3 + $0x78] sm:$0xff]
    %v2192 = vld [vmem:[#allocation3 + $0x80] sm:$0xff]
    %v2193 = vld [vmem:[#allocation3 + $0x88] sm:$0xff]
    %v2194 = vld [vmem:[#allocation3 + $0x90] sm:$0xff]
    %v2195 = vld [vmem:[#allocation3 + $0x98] sm:$0xff]
    %v2197 = vsel %vm1251, %v2175, 0
    %2199 = vmatprep.subr.bf16.mxu0 %v2177
    %2200 = vmatpush1.bf16.msra.mxu0 %v2176
    %2201 = vmatprep.subr.bf16.mxu0 %v2182
    %2202 = vmatpush1.bf16.msra.mxu0 %v2181
    %2203 = vmatprep.subr.bf16.mxu0 %v2187
    %2204 = vmatpush1.bf16.msra.mxu0 %v2186
    %2205 = vmatprep.subr.bf16.mxu0 %v2192
    %2206 = vmatpush1.bf16.msra.mxu0 %v2191
    %2207 = vmatprep.subr.bf16.mxu0 0
    %2208 = vmatpush1.bf16.msra.mxu0 0
    %2209 = vmatprep.subr.bf16.mxu0 0
    %2210 = vmatpush1.bf16.msra.mxu0 0
    %2211 = vmatprep.subr.bf16.mxu0 0
    %2212 = vmatpush1.bf16.msra.mxu0 0
    %2213 = vmatprep.subr.bf16.mxu0 0
    %2214 = vmatpush1.bf16.msra.mxu0 0
    %2215 = vmatprep.subr.bf16.mxu0 0
    %2216 = vmatpush1.bf16.msra.mxu0 0
    %2217 = vmatprep.subr.bf16.mxu0 0
    %2218 = vmatpush1.bf16.msra.mxu0 0
    %2219 = vmatprep.subr.bf16.mxu0 0
    %2220 = vmatpush1.bf16.msra.mxu0 0
    %2221 = vmatprep.subr.bf16.mxu0 0
    %2222 = vmatpush1.bf16.msra.mxu0 0
    %2223 = vmatprep.subr.bf16.mxu0 0
    %2224 = vmatpush1.bf16.msra.mxu0 0
    %2225 = vmatprep.subr.bf16.mxu0 0
    %2226 = vmatpush1.bf16.msra.mxu0 0
    %2227 = vmatprep.subr.bf16.mxu0 0
    %2228 = vmatpush1.bf16.msra.mxu0 0
    %2229 = vmatprep.subr.bf16.mxu0 0
    %2230 = vmatpush1.bf16.msra.mxu0 0
    %2231 = vmatprep.mubr.bf16.mxu0 0
    %2232 = vmatmul.mubr.bf16.gmra.mrb[0].mxu0 %v2197
    %v2233 = vpop.f32.mrb[0].mxu0
    %v2234 = vadd.f32 0.0, %v2233
    %v2235 = vpop.f32.mrb[0].mxu0
    %v2236 = vadd.f32 0.0, %v2235
    %v2237 = vpop.f32.mrb[0].mxu0
    %v2238 = vpop.f32.mrb[0].mxu0
    %2239 = vdwg.mxu0
    %2240 = vmatprep.subr.bf16.mxu0 %v2179
    %2241 = vmatpush1.bf16.msra.mxu0 %v2178
    %2242 = vmatprep.subr.bf16.mxu0 %v2184
    %2243 = vmatpush1.bf16.msra.mxu0 %v2183
    %2244 = vmatprep.subr.bf16.mxu0 %v2189
    %2245 = vmatpush1.bf16.msra.mxu0 %v2188
    %2246 = vmatprep.subr.bf16.mxu0 %v2194
    %2247 = vmatpush1.bf16.msra.mxu0 %v2193
    %2248 = vmatprep.subr.bf16.mxu0 0
    %2249 = vmatpush1.bf16.msra.mxu0 0
    %2250 = vmatprep.subr.bf16.mxu0 0
    %2251 = vmatpush1.bf16.msra.mxu0 0
    %2252 = vmatprep.subr.bf16.mxu0 0
    %2253 = vmatpush1.bf16.msra.mxu0 0
    %2254 = vmatprep.subr.bf16.mxu0 0
    %2255 = vmatpush1.bf16.msra.mxu0 0
    %2256 = vmatprep.subr.bf16.mxu0 0
    %2257 = vmatpush1.bf16.msra.mxu0 0
    %2258 = vmatprep.subr.bf16.mxu0 0
    %2259 = vmatpush1.bf16.msra.mxu0 0
    %2260 = vmatprep.subr.bf16.mxu0 0
    %2261 = vmatpush1.bf16.msra.mxu0 0
    %2262 = vmatprep.subr.bf16.mxu0 0
    %2263 = vmatpush1.bf16.msra.mxu0 0
    %2264 = vmatprep.subr.bf16.mxu0 0
    %2265 = vmatpush1.bf16.msra.mxu0 0
    %2266 = vmatprep.subr.bf16.mxu0 0
    %2267 = vmatpush1.bf16.msra.mxu0 0
    %2268 = vmatprep.subr.bf16.mxu0 0
    %2269 = vmatpush1.bf16.msra.mxu0 0
    %2270 = vmatprep.subr.bf16.mxu0 0
    %2271 = vmatpush1.bf16.msra.mxu0 0
    %2272 = vmatprep.mubr.bf16.mxu0 0
    %2273 = vmatmul.mubr.bf16.gmra.mrb[0].mxu0 %v2197
    %v2274 = vpop.f32.mrb[0].mxu0
    %v2275 = vadd.f32 0.0, %v2274
    %v2276 = vpop.f32.mrb[0].mxu0
    %v2277 = vadd.f32 0.0, %v2276
    %v2278 = vpop.f32.mrb[0].mxu0
    %v2279 = vpop.f32.mrb[0].mxu0
    %2280 = vdwg.mxu0
    %2281 = vmatprep.subr.bf16.mxu0 0
    %2282 = vmatpush1.bf16.msra.mxu0 %v2180
    %2283 = vmatprep.subr.bf16.mxu0 0
    %2284 = vmatpush1.bf16.msra.mxu0 %v2185
    %2285 = vmatprep.subr.bf16.mxu0 0
    %2286 = vmatpush1.bf16.msra.mxu0 %v2190
    %2287 = vmatprep.subr.bf16.mxu0 0
    %2288 = vmatpush1.bf16.msra.mxu0 %v2195
    %2289 = vmatprep.subr.bf16.mxu0 0
    %2290 = vmatpush1.bf16.msra.mxu0 0
    %2291 = vmatprep.subr.bf16.mxu0 0
    %2292 = vmatpush1.bf16.msra.mxu0 0
    %2293 = vmatprep.subr.bf16.mxu0 0
    %2294 = vmatpush1.bf16.msra.mxu0 0
    %2295 = vmatprep.subr.bf16.mxu0 0
    %2296 = vmatpush1.bf16.msra.mxu0 0
    %2297 = vmatprep.subr.bf16.mxu0 0
    %2298 = vmatpush1.bf16.msra.mxu0 0
    %2299 = vmatprep.subr.bf16.mxu0 0
    %2300 = vmatpush1.bf16.msra.mxu0 0
    %2301 = vmatprep.subr.bf16.mxu0 0
    %2302 = vmatpush1.bf16.msra.mxu0 0
    %2303 = vmatprep.subr.bf16.mxu0 0
    %2304 = vmatpush1.bf16.msra.mxu0 0
    %2305 = vmatprep.subr.bf16.mxu0 0
    %2306 = vmatpush1.bf16.msra.mxu0 0
    %2307 = vmatprep.subr.bf16.mxu0 0
    %2308 = vmatpush1.bf16.msra.mxu0 0
    %2309 = vmatprep.subr.bf16.mxu0 0
    %2310 = vmatpush1.bf16.msra.mxu0 0
    %2311 = vmatprep.subr.bf16.mxu0 0
    %2312 = vmatpush1.bf16.msra.mxu0 0
    %2313 = vmatprep.mubr.bf16.mxu0 0
    %2314 = vmatmul.mubr.bf16.gmra.mrb[0].mxu0 %v2197
    %v2315 = vpop.f32.mrb[0].mxu0
    %v2316 = vadd.f32 0.0, %v2315
    %v2317 = vpop.f32.mrb[0].mxu0
    %v2318 = vpop.f32.mrb[0].mxu0
    %v2319 = vpop.f32.mrb[0].mxu0
    %2320 = vdwg.mxu0
    %v2321 = vmin.f32 %v2234, 20.0
    %v2322 = vmin.f32 %v2236, 20.0
    %v2323 = vmin.f32 %v2275, 20.0
    %v2324 = vmin.f32 %v2277, 20.0
    %v2325 = vmin.f32 %v2316, 20.0
    %v2326 = vmul.f32 %v2321, 1.442695
    %v2327 = vpow.pop %v2326
    %v2328 = vmul.f32 %v2322, 1.442695
    %v2329 = vpow.pop %v2328
    %v2330 = vmul.f32 %v2323, 1.442695
    %v2331 = vpow.pop %v2330
    %v2332 = vmul.f32 %v2324, 1.442695
    %v2333 = vpow.pop %v2332
    %v2334 = vmul.f32 %v2325, 1.442695
    %v2335 = vpow.pop %v2334
    %v2336 = vadd.f32 %v2327, 1.0
    %v2337 = vlog2.pop %v2336
    %v2338 = vmul.f32 %v2337, 0.6931472
    %v2339 = vmul.f32 -0.5, %v2327
    %v2340 = vadd.f32 %v2339, 1.0
    %v2341 = vmul.f32 %v2340, %v2327
    %v2342 = vand.u32 2147483647, %v2327
    %vm2343 = vcmp.lt.f32.partialorder %v2342, 0.0004427343
    %v2344 = vsel %vm2343, %v2341, %v2338
    %v2345 = vadd.f32 %v2329, 1.0
    %v2346 = vlog2.pop %v2345
    %v2347 = vmul.f32 %v2346, 0.6931472
    %v2348 = vmul.f32 -0.5, %v2329
    %v2349 = vadd.f32 %v2348, 1.0
    %v2350 = vmul.f32 %v2349, %v2329
    %v2351 = vand.u32 2147483647, %v2329
    %vm2352 = vcmp.lt.f32.partialorder %v2351, 0.0004427343
    %v2353 = vsel %vm2352, %v2350, %v2347
    %v2354 = vadd.f32 %v2331, 1.0
    %v2355 = vlog2.pop %v2354
    %v2356 = vmul.f32 %v2355, 0.6931472
    %v2357 = vmul.f32 -0.5, %v2331
    %v2358 = vadd.f32 %v2357, 1.0
    %v2359 = vmul.f32 %v2358, %v2331
    %v2360 = vand.u32 2147483647, %v2331
    %vm2361 = vcmp.lt.f32.partialorder %v2360, 0.0004427343
    %v2362 = vsel %vm2361, %v2359, %v2356
    %v2363 = vadd.f32 %v2333, 1.0
    %v2364 = vlog2.pop %v2363
    %v2365 = vmul.f32 %v2364, 0.6931472
    %v2366 = vmul.f32 -0.5, %v2333
    %v2367 = vadd.f32 %v2366, 1.0
    %v2368 = vmul.f32 %v2367, %v2333
    %v2369 = vand.u32 2147483647, %v2333
    %vm2370 = vcmp.lt.f32.partialorder %v2369, 0.0004427343
    %v2371 = vsel %vm2370, %v2368, %v2365
    %v2372 = vadd.f32 %v2335, 1.0
    %v2373 = vlog2.pop %v2372
    %v2374 = vmul.f32 %v2373, 0.6931472
    %v2375 = vmul.f32 -0.5, %v2335
    %v2376 = vadd.f32 %v2375, 1.0
    %v2377 = vmul.f32 %v2376, %v2335
    %v2378 = vand.u32 2147483647, %v2335
    %vm2379 = vcmp.lt.f32.partialorder %v2378, 0.0004427343
    %v2380 = vsel %vm2379, %v2377, %v2374
    %vm2381 = vcmp.gt.f32.partialorder %v2234, 20.0
    %vm2382 = vcmp.gt.f32.partialorder %v2236, 20.0
    %vm2383 = vcmp.gt.f32.partialorder %v2275, 20.0
    %vm2384 = vcmp.gt.f32.partialorder %v2277, 20.0
    %vm2385 = vcmp.gt.f32.partialorder %v2316, 20.0
    %v2386 = vsel %vm2381, %v2234, %v2344
    %v2387 = vsel %vm2382, %v2236, %v2353
    %v2388 = vsel %vm2383, %v2275, %v2362
    %v2389 = vsel %vm2384, %v2277, %v2371
    %v2390 = vsel %vm2385, %v2316, %v2380
    %v2391 = vld [vmem:[#allocation4] sm:$0x1]
    %vm2392 = vcmask 1040384
    %v2393 = vsel %vm2392, %v2386, 0.0
    %v2394 = vsel %vm2392, %v2387, 0.0
    %v2395 = vadd.f32 %v2393, %v2394
    %v2396 = vsel %vm2392, %v2388, 0.0
    %v2397 = vadd.f32 %v2395, %v2396
    %v2398 = vsel %vm2392, %v2389, 0.0
    %v2399 = vadd.f32 %v2397, %v2398
    %v2400 = vsel %vm2392, %v2390, 0.0
    %v2401 = vadd.f32 %v2399, %v2400
    %2402 = vadd.xlane.f32.xlu0 %v2401
    %v2403 = vpop.xlane.xlu0 %2402
    %v2404 = vadd.f32 %v2391, %v2403
    %vm2405 = vcmask 0
    %2406 = vst.msk [vmem:[#allocation4] sm:$0x1] %vm2405, %v2404
    // Predicated region
    $region22: #{tpu_custom_call.1} parent=1 // pred_check
      _
    $region23: #{tpu_custom_call.1} parent=1 // pred_check_branch
      %2408 = sbr.rel (0) target = $region25
    $region24: #{tpu_custom_call.1} parent=1 // pred_region
      %s2410 = ssub.s32 16, 16
      %2411 = vsyncadd [#allocation5], %s2410
      %s2413 = sshll.u32 [#allocation4], 4
      %s2414 = int_to_ptr.vmem [resolvable:$true] %s2413
      %2416 = dma.vmem_to_hbm [thread:$0]  %s2414, 16, %s4, [#allocation5]
    $region25: #{tpu_custom_call.1} parent=1 // pred_fallthru
      _
    // Predicated region
    $region26: #{tpu_custom_call.1} parent=1 // pred_check
      _
    $region27: #{tpu_custom_call.1} parent=1 // pred_check_branch
      %2418 = sbr.rel (0) target = $region29
    $region28: #{tpu_custom_call.1} parent=1 // pred_region
      %2419 = dma.done [#allocation5], 16
    $region29: #{tpu_custom_call.1} parent=1 // pred_fallthru
      _
    %2420 = vsyncpa [#allocation5], 1

</llo_original>
